<compile_context>
chip_gen: v7x
topology: tpu7x:2x2x1
jax: 0.10.0
libtpu: 0.0.40
codegen_flags: <defaults>
</compile_context>

<pallas_src>
import functools

import jax
import jax.numpy as jnp
from jax import lax
from jax.experimental import pallas as pl
from jax.experimental.pallas import tpu as pltpu

GROUPS = 8
EPS = 1e-5   # nn.GroupNorm default


def _gn_swish(x, gamma, beta, C, HW):
    """GroupNorm (two-pass mean/var) + Swish.  x: (C, HW) f32; gamma/beta: (C, 1) f32."""
    cpg = C // GROUPS
    n = float(cpg * HW)
    # Group reductions via leading-dim split (layout-safe reshape: last dim untouched).
    x3 = x.reshape(GROUPS, cpg, HW)
    gsum = jnp.sum(jnp.sum(x3, axis=2, keepdims=True), axis=1, keepdims=True)   # (G,1,1)
    mean_c = jnp.broadcast_to(gsum / n, (GROUPS, cpg, 1)).reshape(C, 1)         # (C,1)
    d = x - mean_c                                                              # dense (C,HW)
    d3 = (d * d).reshape(GROUPS, cpg, HW)
    gss = jnp.sum(jnp.sum(d3, axis=2, keepdims=True), axis=1, keepdims=True)    # (G,1,1)
    var_c = jnp.broadcast_to(gss / n, (GROUPS, cpg, 1)).reshape(C, 1)
    y = d * lax.rsqrt(var_c + EPS) * gamma + beta
    return y * jax.nn.sigmoid(y)                                                # Swish


def _stencil_masks(H, W, HW):
    """Validity masks for the 9 taps of a zero-padded 3x3 conv over a flattened H*W axis."""
    p = lax.broadcasted_iota(jnp.int32, (1, HW), 1)
    xi = jnp.remainder(p, W)
    row_ok = [p >= W, None, p < (H - 1) * W]        # dy = 0, 1, 2
    col_ok = [xi >= 1, None, xi <= W - 2]           # dx = 0, 1, 2
    masks = []
    for dy in range(3):
        for dx in range(3):
            m = row_ok[dy]
            if col_ok[dx] is not None:
                m = col_ok[dx] if m is None else jnp.logical_and(m, col_ok[dx])
            masks.append(m)
    return masks


def _im2col_write(h, col_ref, masks, W, C, HW):
    """Write the 9 shifted+masked taps of h into col_ref[0:9C] (aligned sublane writes)."""
    for dy in range(3):
        for dx in range(3):
            k = dy * 3 + dx
            shift = (-((dy - 1) * W + (dx - 1))) % HW       # static lane rotation
            shifted = pltpu.roll(h, shift=shift, axis=1) if shift else h
            m = masks[k]
            blk = shifted if m is None else jnp.where(m, shifted, 0.0)
            col_ref[k * C:(k + 1) * C, :] = blk.astype(col_ref.dtype)


def resnet_block_kernel(x_ref, g1_ref, b1_ref, g2_ref, b2_ref,
                        w1_ref, w2s_ref, out_ref, col_ref, *, H, W):
    C = x_ref.shape[1]
    HW = H * W
    x = x_ref[0].astype(jnp.float32)                 # (C, HW), lane-dense
    masks = _stencil_masks(H, W, HW)                 # computed once, reused by both convs

    # Stash original input in the tail of the im2col buffer once: the final matmul
    # then computes conv2(h) + skip(x) in a single MXU pass (w2s = [W2_2d | W_skip]).
    col_ref[9 * C:10 * C, :] = x.astype(col_ref.dtype)

    # --- GN1 -> Swish -> conv1 (im2col + single matmul over first 9C rows) ---
    h = _gn_swish(x, g1_ref[...], b1_ref[...], C, HW)
    _im2col_write(h, col_ref, masks, W, C, HW)
    h = jnp.dot(w1_ref[...], col_ref[0:9 * C, :], preferred_element_type=jnp.float32)

    # --- GN2 -> Swish -> fused (conv2 + 1x1 skip) matmul over all 10C rows ---
    h = _gn_swish(h, g2_ref[...], b2_ref[...], C, HW)
    _im2col_write(h, col_ref, masks, W, C, HW)
    out = jnp.dot(w2s_ref[...], col_ref[...], preferred_element_type=jnp.float32)

    out_ref[0] = out.astype(out_ref.dtype)


def resnet_block(x_nchw, params, conv_dtype=jnp.bfloat16):
    N, C, H, W = x_nchw.shape
    assert C % GROUPS == 0
    HW = H * W
    x3 = x_nchw.reshape(N, C, HW)            # NCHW flattened: free reshape, no transpose

    def to_w2d(w_oihw):                      # (Co,Ci,3,3) OIHW -> (Co, 9*Ci), tap-major
        Co, Ci = w_oihw.shape[0], w_oihw.shape[1]
        return jnp.transpose(w_oihw, (0, 2, 3, 1)).reshape(Co, 9 * Ci).astype(conv_dtype)

    w1 = to_w2d(params["w1"])
    # Fused weight for conv2 + skip: (C, 9C) concat (C, C) -> (C, 10C)
    w2s = jnp.concatenate([to_w2d(params["w2"]),
                           params["ws"].astype(conv_dtype)], axis=1)
    g1 = params["g1"].reshape(C, 1).astype(jnp.float32)
    b1 = params["b1"].reshape(C, 1).astype(jnp.float32)
    g2 = params["g2"].reshape(C, 1).astype(jnp.float32)
    b2 = params["b2"].reshape(C, 1).astype(jnp.float32)

    kernel = functools.partial(resnet_block_kernel, H=H, W=W)

    out = pl.pallas_call(
        kernel,
        out_shape=jax.ShapeDtypeStruct((N, C, HW), x_nchw.dtype),
        grid_spec=pltpu.PrefetchScalarGridSpec(
            num_scalar_prefetch=0,
            grid=(N,),                                           # one whole image per step
            in_specs=[
                pl.BlockSpec((1, C, HW), lambda n: (n, 0, 0)),   # x (lane-dense last dim)
                pl.BlockSpec((C, 1), lambda n: (0, 0)),          # gamma1
                pl.BlockSpec((C, 1), lambda n: (0, 0)),          # beta1
                pl.BlockSpec((C, 1), lambda n: (0, 0)),          # gamma2
                pl.BlockSpec((C, 1), lambda n: (0, 0)),          # beta2
                pl.BlockSpec((C, 9 * C), lambda n: (0, 0)),      # conv1 W2d
                pl.BlockSpec((C, 10 * C), lambda n: (0, 0)),     # fused conv2+skip W
            ],
            out_specs=pl.BlockSpec((1, C, HW), lambda n: (n, 0, 0)),
            scratch_shapes=[pltpu.VMEM((10 * C, HW), conv_dtype)],   # im2col + x tail
        ),
        compiler_params=pltpu.CompilerParams(
            dimension_semantics=("parallel",),        # independent images; v7x megacore
            vmem_limit_bytes=32 * 1024 * 1024,
        ),
    )(x3, g1, b1, g2, b2, w1, w2s)

    return out.reshape(N, C, H, W)


def ref_forward(x_nchw, params, matmul_dtype=jnp.float32):
    """Pure-JAX reference matching PyTorch semantics (optionally bf16 matmul operands)."""
    x = jnp.transpose(x_nchw, (0, 2, 3, 1))           # NHWC

    def gn(y, gamma, beta):
        n_, h_, w_, c_ = y.shape
        yr = y.reshape(n_, h_, w_, GROUPS, c_ // GROUPS)
        mean = yr.mean(axis=(1, 2, 4), keepdims=True)
        var = yr.var(axis=(1, 2, 4), keepdims=True)
        yn = ((yr - mean) / jnp.sqrt(var + EPS)).reshape(n_, h_, w_, c_)
        return yn * gamma + beta

    def swish(y):
        return y * jax.nn.sigmoid(y)

    def conv3(y, w_oihw):
        w = jnp.transpose(w_oihw, (2, 3, 1, 0))       # OIHW -> HWIO
        return lax.conv_general_dilated(
            y.astype(matmul_dtype), w.astype(matmul_dtype), (1, 1), ((1, 1), (1, 1)),
            dimension_numbers=("NHWC", "HWIO", "NHWC"),
            preferred_element_type=jnp.float32)

    h = conv3(swish(gn(x, params["g1"], params["b1"])), params["w1"])
    h = conv3(swish(gn(h, params["g2"], params["b2"])), params["w2"])
    skip = jnp.einsum("nhwc,oc->nhwo", x.astype(matmul_dtype),
                      params["ws"].astype(matmul_dtype),
                      preferred_element_type=jnp.float32)
    out = h + skip
    return jnp.transpose(out, (0, 3, 1, 2))


if __name__ == "__main__":
    N, C, H, W = 2, 16, 16, 16       # in_channels must be divisible by num_groups=8
    key = jax.random.PRNGKey(0)
    k1, k2, k3, kx = jax.random.split(key, 4)

    params = {
        "g1": jnp.ones((C,), jnp.float32),     # GroupNorm defaults: weight=1, bias=0
        "b1": jnp.zeros((C,), jnp.float32),
        "g2": jnp.ones((C,), jnp.float32),
        "b2": jnp.zeros((C,), jnp.float32),
        "w1": jax.random.normal(k1, (C, C, 3, 3), jnp.float32) * 0.1,   # OIHW (PyTorch)
        "w2": jax.random.normal(k2, (C, C, 3, 3), jnp.float32) * 0.1,   # OIHW
        "ws": jax.random.normal(k3, (C, C), jnp.float32) * 0.1,         # (Cout, Cin)
    }
    x = jax.random.normal(kx, (N, C, H, W), jnp.float32)                # NCHW like PyTorch

    # f32 matmul path: tight check against the f32 PyTorch-semantics reference.
    out_f32 = jax.block_until_ready(resnet_block(x, params, conv_dtype=jnp.float32))
    ref_f32 = ref_forward(x, params, jnp.float32)
    assert out_f32.shape == (N, C, H, W), out_f32.shape
    assert jnp.allclose(out_f32, ref_f32, atol=1e-3, rtol=1e-3), \
        float(jnp.max(jnp.abs(out_f32 - ref_f32)))

    # bf16 MXU path (production default): check against a precision-matched reference
    # (bf16 matmul operands, f32 accumulation) and loosely against the full-f32 reference.
    out_bf16 = jax.block_until_ready(resnet_block(x, params, conv_dtype=jnp.bfloat16))
    ref_bf16 = ref_forward(x, params, jnp.bfloat16)
    assert jnp.allclose(out_bf16, ref_bf16, atol=1e-2, rtol=1e-2), \
        float(jnp.max(jnp.abs(out_bf16 - ref_bf16)))
    assert jnp.allclose(out_bf16, ref_f32, atol=5e-2, rtol=5e-2), \
        float(jnp.max(jnp.abs(out_bf16 - ref_f32)))

    print("KERNEL_OK")
</pallas_src>

<mosaic_0001>
module attributes {stable_mosaic.version = 11 : i64} {
  func.func @resnet_block_kernel(%arg0: i32, %arg1: memref<1x16x256xf32, #tpu.memory_space<vmem>>, %arg2: memref<16x1xf32, #tpu.memory_space<vmem>>, %arg3: memref<16x1xf32, #tpu.memory_space<vmem>>, %arg4: memref<16x1xf32, #tpu.memory_space<vmem>>, %arg5: memref<16x1xf32, #tpu.memory_space<vmem>>, %arg6: memref<16x144xf32, #tpu.memory_space<vmem>>, %arg7: memref<16x160xf32, #tpu.memory_space<vmem>>, %arg8: memref<1x16x256xf32, #tpu.memory_space<vmem>>, %arg9: memref<160x256xf32, #tpu.memory_space<vmem>>) attributes {dimension_semantics = [#tpu.dimension_semantics<parallel>], iteration_bounds = array<i64: 2>, scalar_prefetch = 0 : i64, scratch_operands = 1 : i64, tpu.core_type = #tpu.core_type<tc>, window_params = [{transform_indices = @transform_0, window_bounds = array<i64: 1, 16, 256>}, {pipeline_mode = #tpu.pipeline_mode<synchronous>, transform_indices = @transform_1, window_bounds = array<i64: 16, 1>}, {pipeline_mode = #tpu.pipeline_mode<synchronous>, transform_indices = @transform_2, window_bounds = array<i64: 16, 1>}, {pipeline_mode = #tpu.pipeline_mode<synchronous>, transform_indices = @transform_3, window_bounds = array<i64: 16, 1>}, {pipeline_mode = #tpu.pipeline_mode<synchronous>, transform_indices = @transform_4, window_bounds = array<i64: 16, 1>}, {pipeline_mode = #tpu.pipeline_mode<synchronous>, transform_indices = @transform_5, window_bounds = array<i64: 16, 144>}, {pipeline_mode = #tpu.pipeline_mode<synchronous>, transform_indices = @transform_6, window_bounds = array<i64: 16, 160>}, {transform_indices = @transform_7, window_bounds = array<i64: 1, 16, 256>}]} {
    %c0 = arith.constant 0 : index
    %c0_0 = arith.constant 0 : index
    %c0_1 = arith.constant 0 : index
    %0 = vector.load %arg1[%c0, %c0_0, %c0_1] : memref<1x16x256xf32, #tpu.memory_space<vmem>>, vector<1x16x256xf32>
    %1 = vector.shape_cast %0 : vector<1x16x256xf32> to vector<16x256xf32>
    %2 = tpu.iota {dimensions = array<i32: 1>} : vector<1x256xi32>
    %c16_i32 = arith.constant 16 : i32
    %c0_i32 = arith.constant 0 : i32
    %3 = arith.cmpi eq, %c16_i32, %c0_i32 : i32
    %c1_i32 = arith.constant 1 : i32
    %4 = arith.select %3, %c1_i32, %c16_i32 : i32
    %5 = vector.broadcast %4 : i32 to vector<1x256xi32>
    %6 = arith.remsi %2, %5 : vector<1x256xi32>
    %c0_i32_2 = arith.constant 0 : i32
    %7 = vector.broadcast %c0_i32_2 : i32 to vector<1x256xi32>
    %8 = arith.cmpi ne, %6, %7 : vector<1x256xi32>
    %c0_i32_3 = arith.constant 0 : i32
    %9 = vector.broadcast %c0_i32_3 : i32 to vector<1x256xi32>
    %10 = arith.cmpi slt, %6, %9 : vector<1x256xi32>
    %c0_i32_4 = arith.constant 0 : i32
    %11 = arith.cmpi slt, %4, %c0_i32_4 : i32
    %12 = vector.broadcast %11 : i1 to vector<1x256xi1>
    %13 = vector.broadcast %12 : vector<1x256xi1> to vector<1x256xi1>
    %14 = arith.xori %10, %13 : vector<1x256xi1>
    %15 = arith.andi %14, %8 : vector<1x256xi1>
    %16 = vector.broadcast %4 : i32 to vector<1x256xi32>
    %17 = arith.addi %6, %16 : vector<1x256xi32>
    %18 = arith.select %15, %17, %6 : vector<1x256xi1>, vector<1x256xi32>
    %c16_i32_5 = arith.constant 16 : i32
    %19 = vector.broadcast %c16_i32_5 : i32 to vector<1x256xi32>
    %20 = arith.cmpi sge, %2, %19 : vector<1x256xi32>
    %c240_i32 = arith.constant 240 : i32
    %21 = vector.broadcast %c240_i32 : i32 to vector<1x256xi32>
    %22 = arith.cmpi slt, %2, %21 : vector<1x256xi32>
    %c1_i32_6 = arith.constant 1 : i32
    %23 = vector.broadcast %c1_i32_6 : i32 to vector<1x256xi32>
    %24 = arith.cmpi sge, %18, %23 : vector<1x256xi32>
    %c14_i32 = arith.constant 14 : i32
    %25 = vector.broadcast %c14_i32 : i32 to vector<1x256xi32>
    %26 = arith.cmpi sle, %18, %25 : vector<1x256xi32>
    %27 = arith.andi %20, %24 : vector<1x256xi1>
    %28 = arith.andi %20, %26 : vector<1x256xi1>
    %29 = arith.andi %22, %24 : vector<1x256xi1>
    %30 = arith.andi %22, %26 : vector<1x256xi1>
    %c144 = arith.constant 144 : index
    %c0_7 = arith.constant 0 : index
    %31 = vector.load %arg9[%c144, %c0_7] : memref<160x256xf32, #tpu.memory_space<vmem>>, vector<16x256xf32>
    tpu.vector_store %arg9[%c144, %c0_7], %1 {strides = array<i32>} : memref<160x256xf32, #tpu.memory_space<vmem>>, vector<16x256xf32>,
    %c0_8 = arith.constant 0 : index
    %c0_9 = arith.constant 0 : index
    %32 = vector.load %arg2[%c0_8, %c0_9] : memref<16x1xf32, #tpu.memory_space<vmem>>, vector<16x1xf32>
    %c0_10 = arith.constant 0 : index
    %c0_11 = arith.constant 0 : index
    %33 = vector.load %arg3[%c0_10, %c0_11] : memref<16x1xf32, #tpu.memory_space<vmem>>, vector<16x1xf32>
    %34 = vector.shape_cast %1 : vector<16x256xf32> to vector<8x2x256xf32>
    %cst = arith.constant dense<0.000000e+00> : vector<8x2xf32>
    %35 = vector.multi_reduction <add>, %34, %cst [2] : vector<8x2x256xf32> to vector<8x2xf32>
    %36 = vector.shape_cast %35 : vector<8x2xf32> to vector<8x2x1xf32>
    %cst_12 = arith.constant dense<0.000000e+00> : vector<8x1xf32>
    %37 = vector.multi_reduction <add>, %36, %cst_12 [1] : vector<8x2x1xf32> to vector<8x1xf32>
    %38 = vector.shape_cast %37 : vector<8x1xf32> to vector<8x1x1xf32>
    %cst_13 = arith.constant 5.120000e+02 : f32
    %39 = vector.broadcast %cst_13 : f32 to vector<8x1x1xf32>
    %40 = arith.divf %38, %39 : vector<8x1x1xf32>
    %41 = vector.shape_cast %40 : vector<8x1x1xf32> to vector<8x1x1xf32>
    %42 = vector.broadcast %41 : vector<8x1x1xf32> to vector<8x2x1xf32>
    %43 = vector.shape_cast %42 : vector<8x2x1xf32> to vector<16x1xf32>
    %44 = vector.broadcast %43 : vector<16x1xf32> to vector<16x256xf32>
    %45 = arith.subf %1, %44 : vector<16x256xf32>
    %46 = arith.mulf %45, %45 : vector<16x256xf32>
    %47 = vector.shape_cast %46 : vector<16x256xf32> to vector<8x2x256xf32>
    %cst_14 = arith.constant dense<0.000000e+00> : vector<8x2xf32>
    %48 = vector.multi_reduction <add>, %47, %cst_14 [2] : vector<8x2x256xf32> to vector<8x2xf32>
    %49 = vector.shape_cast %48 : vector<8x2xf32> to vector<8x2x1xf32>
    %cst_15 = arith.constant dense<0.000000e+00> : vector<8x1xf32>
    %50 = vector.multi_reduction <add>, %49, %cst_15 [1] : vector<8x2x1xf32> to vector<8x1xf32>
    %51 = vector.shape_cast %50 : vector<8x1xf32> to vector<8x1x1xf32>
    %cst_16 = arith.constant 5.120000e+02 : f32
    %52 = vector.broadcast %cst_16 : f32 to vector<8x1x1xf32>
    %53 = arith.divf %51, %52 : vector<8x1x1xf32>
    %54 = vector.shape_cast %53 : vector<8x1x1xf32> to vector<8x1x1xf32>
    %55 = vector.broadcast %54 : vector<8x1x1xf32> to vector<8x2x1xf32>
    %56 = vector.shape_cast %55 : vector<8x2x1xf32> to vector<16x1xf32>
    %cst_17 = arith.constant 9.99999974E-6 : f32
    %57 = vector.broadcast %cst_17 : f32 to vector<16x1xf32>
    %58 = arith.addf %56, %57 : vector<16x1xf32>
    %59 = math.rsqrt %58 : vector<16x1xf32>
    %60 = vector.broadcast %59 : vector<16x1xf32> to vector<16x256xf32>
    %61 = arith.mulf %45, %60 : vector<16x256xf32>
    %62 = vector.broadcast %32 : vector<16x1xf32> to vector<16x256xf32>
    %63 = arith.mulf %61, %62 : vector<16x256xf32>
    %64 = vector.broadcast %33 : vector<16x1xf32> to vector<16x256xf32>
    %65 = arith.addf %63, %64 : vector<16x256xf32>
    %66 = arith.negf %65 : vector<16x256xf32>
    %67 = math.exp %66 : vector<16x256xf32>
    %cst_18 = arith.constant 1.000000e+00 : f32
    %68 = vector.broadcast %cst_18 : f32 to vector<16x256xf32>
    %69 = arith.addf %68, %67 : vector<16x256xf32>
    %70 = arith.divf %68, %69 : vector<16x256xf32>
    %71 = arith.mulf %65, %70 : vector<16x256xf32>
    %c17_i32 = arith.constant 17 : i32
    %72 = tpu.dynamic_rotate %71 by %c17_i32 dim 1 : vector<16x256xf32>, i32 -> vector<16x256xf32>
    %cst_19 = arith.constant 0.000000e+00 : f32
    %73 = vector.shape_cast %27 : vector<1x256xi1> to vector<1x256xi1>
    %74 = vector.broadcast %73 : vector<1x256xi1> to vector<16x256xi1>
    %75 = vector.broadcast %cst_19 : f32 to vector<16x256xf32>
    %76 = arith.select %74, %72, %75 : vector<16x256xi1>, vector<16x256xf32>
    %c0_20 = arith.constant 0 : index
    %c0_21 = arith.constant 0 : index
    %77 = vector.load %arg9[%c0_20, %c0_21] : memref<160x256xf32, #tpu.memory_space<vmem>>, vector<16x256xf32>
    tpu.vector_store %arg9[%c0_20, %c0_21], %76 {strides = array<i32>} : memref<160x256xf32, #tpu.memory_space<vmem>>, vector<16x256xf32>,
    %c16_i32_22 = arith.constant 16 : i32
    %78 = tpu.dynamic_rotate %71 by %c16_i32_22 dim 1 : vector<16x256xf32>, i32 -> vector<16x256xf32>
    %cst_23 = arith.constant 0.000000e+00 : f32
    %79 = vector.shape_cast %20 : vector<1x256xi1> to vector<1x256xi1>
    %80 = vector.broadcast %79 : vector<1x256xi1> to vector<16x256xi1>
    %81 = vector.broadcast %cst_23 : f32 to vector<16x256xf32>
    %82 = arith.select %80, %78, %81 : vector<16x256xi1>, vector<16x256xf32>
    %c16 = arith.constant 16 : index
    %c0_24 = arith.constant 0 : index
    %83 = vector.load %arg9[%c16, %c0_24] : memref<160x256xf32, #tpu.memory_space<vmem>>, vector<16x256xf32>
    tpu.vector_store %arg9[%c16, %c0_24], %82 {strides = array<i32>} : memref<160x256xf32, #tpu.memory_space<vmem>>, vector<16x256xf32>,
    %c15_i32 = arith.constant 15 : i32
    %84 = tpu.dynamic_rotate %71 by %c15_i32 dim 1 : vector<16x256xf32>, i32 -> vector<16x256xf32>
    %cst_25 = arith.constant 0.000000e+00 : f32
    %85 = vector.shape_cast %28 : vector<1x256xi1> to vector<1x256xi1>
    %86 = vector.broadcast %85 : vector<1x256xi1> to vector<16x256xi1>
    %87 = vector.broadcast %cst_25 : f32 to vector<16x256xf32>
    %88 = arith.select %86, %84, %87 : vector<16x256xi1>, vector<16x256xf32>
    %c32 = arith.constant 32 : index
    %c0_26 = arith.constant 0 : index
    %89 = vector.load %arg9[%c32, %c0_26] : memref<160x256xf32, #tpu.memory_space<vmem>>, vector<16x256xf32>
    tpu.vector_store %arg9[%c32, %c0_26], %88 {strides = array<i32>} : memref<160x256xf32, #tpu.memory_space<vmem>>, vector<16x256xf32>,
    %c1_i32_27 = arith.constant 1 : i32
    %90 = tpu.dynamic_rotate %71 by %c1_i32_27 dim 1 : vector<16x256xf32>, i32 -> vector<16x256xf32>
    %cst_28 = arith.constant 0.000000e+00 : f32
    %91 = vector.shape_cast %24 : vector<1x256xi1> to vector<1x256xi1>
    %92 = vector.broadcast %91 : vector<1x256xi1> to vector<16x256xi1>
    %93 = vector.broadcast %cst_28 : f32 to vector<16x256xf32>
    %94 = arith.select %92, %90, %93 : vector<16x256xi1>, vector<16x256xf32>
    %c48 = arith.constant 48 : index
    %c0_29 = arith.constant 0 : index
    %95 = vector.load %arg9[%c48, %c0_29] : memref<160x256xf32, #tpu.memory_space<vmem>>, vector<16x256xf32>
    tpu.vector_store %arg9[%c48, %c0_29], %94 {strides = array<i32>} : memref<160x256xf32, #tpu.memory_space<vmem>>, vector<16x256xf32>,
    %c64 = arith.constant 64 : index
    %c0_30 = arith.constant 0 : index
    %96 = vector.load %arg9[%c64, %c0_30] : memref<160x256xf32, #tpu.memory_space<vmem>>, vector<16x256xf32>
    tpu.vector_store %arg9[%c64, %c0_30], %71 {strides = array<i32>} : memref<160x256xf32, #tpu.memory_space<vmem>>, vector<16x256xf32>,
    %c255_i32 = arith.constant 255 : i32
    %97 = tpu.dynamic_rotate %71 by %c255_i32 dim 1 : vector<16x256xf32>, i32 -> vector<16x256xf32>
    %cst_31 = arith.constant 0.000000e+00 : f32
    %98 = vector.shape_cast %26 : vector<1x256xi1> to vector<1x256xi1>
    %99 = vector.broadcast %98 : vector<1x256xi1> to vector<16x256xi1>
    %100 = vector.broadcast %cst_31 : f32 to vector<16x256xf32>
    %101 = arith.select %99, %97, %100 : vector<16x256xi1>, vector<16x256xf32>
    %c80 = arith.constant 80 : index
    %c0_32 = arith.constant 0 : index
    %102 = vector.load %arg9[%c80, %c0_32] : memref<160x256xf32, #tpu.memory_space<vmem>>, vector<16x256xf32>
    tpu.vector_store %arg9[%c80, %c0_32], %101 {strides = array<i32>} : memref<160x256xf32, #tpu.memory_space<vmem>>, vector<16x256xf32>,
    %c241_i32 = arith.constant 241 : i32
    %103 = tpu.dynamic_rotate %71 by %c241_i32 dim 1 : vector<16x256xf32>, i32 -> vector<16x256xf32>
    %cst_33 = arith.constant 0.000000e+00 : f32
    %104 = vector.shape_cast %29 : vector<1x256xi1> to vector<1x256xi1>
    %105 = vector.broadcast %104 : vector<1x256xi1> to vector<16x256xi1>
    %106 = vector.broadcast %cst_33 : f32 to vector<16x256xf32>
    %107 = arith.select %105, %103, %106 : vector<16x256xi1>, vector<16x256xf32>
    %c96 = arith.constant 96 : index
    %c0_34 = arith.constant 0 : index
    %108 = vector.load %arg9[%c96, %c0_34] : memref<160x256xf32, #tpu.memory_space<vmem>>, vector<16x256xf32>
    tpu.vector_store %arg9[%c96, %c0_34], %107 {strides = array<i32>} : memref<160x256xf32, #tpu.memory_space<vmem>>, vector<16x256xf32>,
    %c240_i32_35 = arith.constant 240 : i32
    %109 = tpu.dynamic_rotate %71 by %c240_i32_35 dim 1 : vector<16x256xf32>, i32 -> vector<16x256xf32>
    %cst_36 = arith.constant 0.000000e+00 : f32
    %110 = vector.shape_cast %22 : vector<1x256xi1> to vector<1x256xi1>
    %111 = vector.broadcast %110 : vector<1x256xi1> to vector<16x256xi1>
    %112 = vector.broadcast %cst_36 : f32 to vector<16x256xf32>
    %113 = arith.select %111, %109, %112 : vector<16x256xi1>, vector<16x256xf32>
    %c112 = arith.constant 112 : index
    %c0_37 = arith.constant 0 : index
    %114 = vector.load %arg9[%c112, %c0_37] : memref<160x256xf32, #tpu.memory_space<vmem>>, vector<16x256xf32>
    tpu.vector_store %arg9[%c112, %c0_37], %113 {strides = array<i32>} : memref<160x256xf32, #tpu.memory_space<vmem>>, vector<16x256xf32>,
    %c239_i32 = arith.constant 239 : i32
    %115 = tpu.dynamic_rotate %71 by %c239_i32 dim 1 : vector<16x256xf32>, i32 -> vector<16x256xf32>
    %cst_38 = arith.constant 0.000000e+00 : f32
    %116 = vector.shape_cast %30 : vector<1x256xi1> to vector<1x256xi1>
    %117 = vector.broadcast %116 : vector<1x256xi1> to vector<16x256xi1>
    %118 = vector.broadcast %cst_38 : f32 to vector<16x256xf32>
    %119 = arith.select %117, %115, %118 : vector<16x256xi1>, vector<16x256xf32>
    %c128 = arith.constant 128 : index
    %c0_39 = arith.constant 0 : index
    %120 = vector.load %arg9[%c128, %c0_39] : memref<160x256xf32, #tpu.memory_space<vmem>>, vector<16x256xf32>
    tpu.vector_store %arg9[%c128, %c0_39], %119 {strides = array<i32>} : memref<160x256xf32, #tpu.memory_space<vmem>>, vector<16x256xf32>,
    %c0_40 = arith.constant 0 : index
    %c0_41 = arith.constant 0 : index
    %121 = vector.load %arg6[%c0_40, %c0_41] : memref<16x144xf32, #tpu.memory_space<vmem>>, vector<16x144xf32>
    %c0_42 = arith.constant 0 : index
    %c0_43 = arith.constant 0 : index
    %122 = vector.load %arg9[%c0_42, %c0_43] : memref<160x256xf32, #tpu.memory_space<vmem>>, vector<144x256xf32>
    %cst_44 = arith.constant dense<0.000000e+00> : vector<16x256xf32>
    %123 = tpu.matmul %121, %122, %cst_44 {dimension_numbers = #tpu.dot_dimension_numbers<[1], [0], [0], [1], [0, 0, 1, 1], [], []>} : vector<16x144xf32>, vector<144x256xf32>, vector<16x256xf32> -> vector<16x256xf32>
    %c0_45 = arith.constant 0 : index
    %c0_46 = arith.constant 0 : index
    %124 = vector.load %arg4[%c0_45, %c0_46] : memref<16x1xf32, #tpu.memory_space<vmem>>, vector<16x1xf32>
    %c0_47 = arith.constant 0 : index
    %c0_48 = arith.constant 0 : index
    %125 = vector.load %arg5[%c0_47, %c0_48] : memref<16x1xf32, #tpu.memory_space<vmem>>, vector<16x1xf32>
    %126 = vector.shape_cast %123 : vector<16x256xf32> to vector<8x2x256xf32>
    %cst_49 = arith.constant dense<0.000000e+00> : vector<8x2xf32>
    %127 = vector.multi_reduction <add>, %126, %cst_49 [2] : vector<8x2x256xf32> to vector<8x2xf32>
    %128 = vector.shape_cast %127 : vector<8x2xf32> to vector<8x2x1xf32>
    %cst_50 = arith.constant dense<0.000000e+00> : vector<8x1xf32>
    %129 = vector.multi_reduction <add>, %128, %cst_50 [1] : vector<8x2x1xf32> to vector<8x1xf32>
    %130 = vector.shape_cast %129 : vector<8x1xf32> to vector<8x1x1xf32>
    %cst_51 = arith.constant 5.120000e+02 : f32
    %131 = vector.broadcast %cst_51 : f32 to vector<8x1x1xf32>
    %132 = arith.divf %130, %131 : vector<8x1x1xf32>
    %133 = vector.shape_cast %132 : vector<8x1x1xf32> to vector<8x1x1xf32>
    %134 = vector.broadcast %133 : vector<8x1x1xf32> to vector<8x2x1xf32>
    %135 = vector.shape_cast %134 : vector<8x2x1xf32> to vector<16x1xf32>
    %136 = vector.broadcast %135 : vector<16x1xf32> to vector<16x256xf32>
    %137 = arith.subf %123, %136 : vector<16x256xf32>
    %138 = arith.mulf %137, %137 : vector<16x256xf32>
    %139 = vector.shape_cast %138 : vector<16x256xf32> to vector<8x2x256xf32>
    %cst_52 = arith.constant dense<0.000000e+00> : vector<8x2xf32>
    %140 = vector.multi_reduction <add>, %139, %cst_52 [2] : vector<8x2x256xf32> to vector<8x2xf32>
    %141 = vector.shape_cast %140 : vector<8x2xf32> to vector<8x2x1xf32>
    %cst_53 = arith.constant dense<0.000000e+00> : vector<8x1xf32>
    %142 = vector.multi_reduction <add>, %141, %cst_53 [1] : vector<8x2x1xf32> to vector<8x1xf32>
    %143 = vector.shape_cast %142 : vector<8x1xf32> to vector<8x1x1xf32>
    %cst_54 = arith.constant 5.120000e+02 : f32
    %144 = vector.broadcast %cst_54 : f32 to vector<8x1x1xf32>
    %145 = arith.divf %143, %144 : vector<8x1x1xf32>
    %146 = vector.shape_cast %145 : vector<8x1x1xf32> to vector<8x1x1xf32>
    %147 = vector.broadcast %146 : vector<8x1x1xf32> to vector<8x2x1xf32>
    %148 = vector.shape_cast %147 : vector<8x2x1xf32> to vector<16x1xf32>
    %cst_55 = arith.constant 9.99999974E-6 : f32
    %149 = vector.broadcast %cst_55 : f32 to vector<16x1xf32>
    %150 = arith.addf %148, %149 : vector<16x1xf32>
    %151 = math.rsqrt %150 : vector<16x1xf32>
    %152 = vector.broadcast %151 : vector<16x1xf32> to vector<16x256xf32>
    %153 = arith.mulf %137, %152 : vector<16x256xf32>
    %154 = vector.broadcast %124 : vector<16x1xf32> to vector<16x256xf32>
    %155 = arith.mulf %153, %154 : vector<16x256xf32>
    %156 = vector.broadcast %125 : vector<16x1xf32> to vector<16x256xf32>
    %157 = arith.addf %155, %156 : vector<16x256xf32>
    %158 = arith.negf %157 : vector<16x256xf32>
    %159 = math.exp %158 : vector<16x256xf32>
    %cst_56 = arith.constant 1.000000e+00 : f32
    %160 = vector.broadcast %cst_56 : f32 to vector<16x256xf32>
    %161 = arith.addf %160, %159 : vector<16x256xf32>
    %162 = arith.divf %160, %161 : vector<16x256xf32>
    %163 = arith.mulf %157, %162 : vector<16x256xf32>
    %c17_i32_57 = arith.constant 17 : i32
    %164 = tpu.dynamic_rotate %163 by %c17_i32_57 dim 1 : vector<16x256xf32>, i32 -> vector<16x256xf32>
    %cst_58 = arith.constant 0.000000e+00 : f32
    %165 = vector.shape_cast %27 : vector<1x256xi1> to vector<1x256xi1>
    %166 = vector.broadcast %165 : vector<1x256xi1> to vector<16x256xi1>
    %167 = vector.broadcast %cst_58 : f32 to vector<16x256xf32>
    %168 = arith.select %166, %164, %167 : vector<16x256xi1>, vector<16x256xf32>
    %c0_59 = arith.constant 0 : index
    %c0_60 = arith.constant 0 : index
    %169 = vector.load %arg9[%c0_59, %c0_60] : memref<160x256xf32, #tpu.memory_space<vmem>>, vector<16x256xf32>
    tpu.vector_store %arg9[%c0_59, %c0_60], %168 {strides = array<i32>} : memref<160x256xf32, #tpu.memory_space<vmem>>, vector<16x256xf32>,
    %c16_i32_61 = arith.constant 16 : i32
    %170 = tpu.dynamic_rotate %163 by %c16_i32_61 dim 1 : vector<16x256xf32>, i32 -> vector<16x256xf32>
    %cst_62 = arith.constant 0.000000e+00 : f32
    %171 = vector.shape_cast %20 : vector<1x256xi1> to vector<1x256xi1>
    %172 = vector.broadcast %171 : vector<1x256xi1> to vector<16x256xi1>
    %173 = vector.broadcast %cst_62 : f32 to vector<16x256xf32>
    %174 = arith.select %172, %170, %173 : vector<16x256xi1>, vector<16x256xf32>
    %c16_63 = arith.constant 16 : index
    %c0_64 = arith.constant 0 : index
    %175 = vector.load %arg9[%c16_63, %c0_64] : memref<160x256xf32, #tpu.memory_space<vmem>>, vector<16x256xf32>
    tpu.vector_store %arg9[%c16_63, %c0_64], %174 {strides = array<i32>} : memref<160x256xf32, #tpu.memory_space<vmem>>, vector<16x256xf32>,
    %c15_i32_65 = arith.constant 15 : i32
    %176 = tpu.dynamic_rotate %163 by %c15_i32_65 dim 1 : vector<16x256xf32>, i32 -> vector<16x256xf32>
    %cst_66 = arith.constant 0.000000e+00 : f32
    %177 = vector.shape_cast %28 : vector<1x256xi1> to vector<1x256xi1>
    %178 = vector.broadcast %177 : vector<1x256xi1> to vector<16x256xi1>
    %179 = vector.broadcast %cst_66 : f32 to vector<16x256xf32>
    %180 = arith.select %178, %176, %179 : vector<16x256xi1>, vector<16x256xf32>
    %c32_67 = arith.constant 32 : index
    %c0_68 = arith.constant 0 : index
    %181 = vector.load %arg9[%c32_67, %c0_68] : memref<160x256xf32, #tpu.memory_space<vmem>>, vector<16x256xf32>
    tpu.vector_store %arg9[%c32_67, %c0_68], %180 {strides = array<i32>} : memref<160x256xf32, #tpu.memory_space<vmem>>, vector<16x256xf32>,
    %c1_i32_69 = arith.constant 1 : i32
    %182 = tpu.dynamic_rotate %163 by %c1_i32_69 dim 1 : vector<16x256xf32>, i32 -> vector<16x256xf32>
    %cst_70 = arith.constant 0.000000e+00 : f32
    %183 = vector.shape_cast %24 : vector<1x256xi1> to vector<1x256xi1>
    %184 = vector.broadcast %183 : vector<1x256xi1> to vector<16x256xi1>
    %185 = vector.broadcast %cst_70 : f32 to vector<16x256xf32>
    %186 = arith.select %184, %182, %185 : vector<16x256xi1>, vector<16x256xf32>
    %c48_71 = arith.constant 48 : index
    %c0_72 = arith.constant 0 : index
    %187 = vector.load %arg9[%c48_71, %c0_72] : memref<160x256xf32, #tpu.memory_space<vmem>>, vector<16x256xf32>
    tpu.vector_store %arg9[%c48_71, %c0_72], %186 {strides = array<i32>} : memref<160x256xf32, #tpu.memory_space<vmem>>, vector<16x256xf32>,
    %c64_73 = arith.constant 64 : index
    %c0_74 = arith.constant 0 : index
    %188 = vector.load %arg9[%c64_73, %c0_74] : memref<160x256xf32, #tpu.memory_space<vmem>>, vector<16x256xf32>
    tpu.vector_store %arg9[%c64_73, %c0_74], %163 {strides = array<i32>} : memref<160x256xf32, #tpu.memory_space<vmem>>, vector<16x256xf32>,
    %c255_i32_75 = arith.constant 255 : i32
    %189 = tpu.dynamic_rotate %163 by %c255_i32_75 dim 1 : vector<16x256xf32>, i32 -> vector<16x256xf32>
    %cst_76 = arith.constant 0.000000e+00 : f32
    %190 = vector.shape_cast %26 : vector<1x256xi1> to vector<1x256xi1>
    %191 = vector.broadcast %190 : vector<1x256xi1> to vector<16x256xi1>
    %192 = vector.broadcast %cst_76 : f32 to vector<16x256xf32>
    %193 = arith.select %191, %189, %192 : vector<16x256xi1>, vector<16x256xf32>
    %c80_77 = arith.constant 80 : index
    %c0_78 = arith.constant 0 : index
    %194 = vector.load %arg9[%c80_77, %c0_78] : memref<160x256xf32, #tpu.memory_space<vmem>>, vector<16x256xf32>
    tpu.vector_store %arg9[%c80_77, %c0_78], %193 {strides = array<i32>} : memref<160x256xf32, #tpu.memory_space<vmem>>, vector<16x256xf32>,
    %c241_i32_79 = arith.constant 241 : i32
    %195 = tpu.dynamic_rotate %163 by %c241_i32_79 dim 1 : vector<16x256xf32>, i32 -> vector<16x256xf32>
    %cst_80 = arith.constant 0.000000e+00 : f32
    %196 = vector.shape_cast %29 : vector<1x256xi1> to vector<1x256xi1>
    %197 = vector.broadcast %196 : vector<1x256xi1> to vector<16x256xi1>
    %198 = vector.broadcast %cst_80 : f32 to vector<16x256xf32>
    %199 = arith.select %197, %195, %198 : vector<16x256xi1>, vector<16x256xf32>
    %c96_81 = arith.constant 96 : index
    %c0_82 = arith.constant 0 : index
    %200 = vector.load %arg9[%c96_81, %c0_82] : memref<160x256xf32, #tpu.memory_space<vmem>>, vector<16x256xf32>
    tpu.vector_store %arg9[%c96_81, %c0_82], %199 {strides = array<i32>} : memref<160x256xf32, #tpu.memory_space<vmem>>, vector<16x256xf32>,
    %c240_i32_83 = arith.constant 240 : i32
    %201 = tpu.dynamic_rotate %163 by %c240_i32_83 dim 1 : vector<16x256xf32>, i32 -> vector<16x256xf32>
    %cst_84 = arith.constant 0.000000e+00 : f32
    %202 = vector.shape_cast %22 : vector<1x256xi1> to vector<1x256xi1>
    %203 = vector.broadcast %202 : vector<1x256xi1> to vector<16x256xi1>
    %204 = vector.broadcast %cst_84 : f32 to vector<16x256xf32>
    %205 = arith.select %203, %201, %204 : vector<16x256xi1>, vector<16x256xf32>
    %c112_85 = arith.constant 112 : index
    %c0_86 = arith.constant 0 : index
    %206 = vector.load %arg9[%c112_85, %c0_86] : memref<160x256xf32, #tpu.memory_space<vmem>>, vector<16x256xf32>
    tpu.vector_store %arg9[%c112_85, %c0_86], %205 {strides = array<i32>} : memref<160x256xf32, #tpu.memory_space<vmem>>, vector<16x256xf32>,
    %c239_i32_87 = arith.constant 239 : i32
    %207 = tpu.dynamic_rotate %163 by %c239_i32_87 dim 1 : vector<16x256xf32>, i32 -> vector<16x256xf32>
    %cst_88 = arith.constant 0.000000e+00 : f32
    %208 = vector.shape_cast %30 : vector<1x256xi1> to vector<1x256xi1>
    %209 = vector.broadcast %208 : vector<1x256xi1> to vector<16x256xi1>
    %210 = vector.broadcast %cst_88 : f32 to vector<16x256xf32>
    %211 = arith.select %209, %207, %210 : vector<16x256xi1>, vector<16x256xf32>
    %c128_89 = arith.constant 128 : index
    %c0_90 = arith.constant 0 : index
    %212 = vector.load %arg9[%c128_89, %c0_90] : memref<160x256xf32, #tpu.memory_space<vmem>>, vector<16x256xf32>
    tpu.vector_store %arg9[%c128_89, %c0_90], %211 {strides = array<i32>} : memref<160x256xf32, #tpu.memory_space<vmem>>, vector<16x256xf32>,
    %c0_91 = arith.constant 0 : index
    %c0_92 = arith.constant 0 : index
    %213 = vector.load %arg7[%c0_91, %c0_92] : memref<16x160xf32, #tpu.memory_space<vmem>>, vector<16x160xf32>
    %c0_93 = arith.constant 0 : index
    %c0_94 = arith.constant 0 : index
    %214 = vector.load %arg9[%c0_93, %c0_94] : memref<160x256xf32, #tpu.memory_space<vmem>>, vector<160x256xf32>
    %cst_95 = arith.constant dense<0.000000e+00> : vector<16x256xf32>
    %215 = tpu.matmul %213, %214, %cst_95 {dimension_numbers = #tpu.dot_dimension_numbers<[1], [0], [0], [1], [0, 0, 1, 1], [], []>} : vector<16x160xf32>, vector<160x256xf32>, vector<16x256xf32> -> vector<16x256xf32>
    %c0_96 = arith.constant 0 : index
    %c0_97 = arith.constant 0 : index
    %c0_98 = arith.constant 0 : index
    %216 = vector.load %arg8[%c0_96, %c0_97, %c0_98] : memref<1x16x256xf32, #tpu.memory_space<vmem>>, vector<1x16x256xf32>
    %217 = vector.shape_cast %216 : vector<1x16x256xf32> to vector<16x256xf32>
    %218 = vector.shape_cast %215 : vector<16x256xf32> to vector<1x16x256xf32>
    tpu.vector_store %arg8[%c0_96, %c0_97, %c0_98], %218 {strides = array<i32>} : memref<1x16x256xf32, #tpu.memory_space<vmem>>, vector<1x16x256xf32>,
    return
  }
  func.func @transform_0(%arg0: i32) -> (i32, i32, i32) {
    %c0_i32 = arith.constant 0 : i32
    %c0_i32_0 = arith.constant 0 : i32
    %c0_i32_1 = arith.constant 0 : i32
    return %arg0, %c0_i32, %c0_i32_0 : i32, i32, i32
  }
  func.func @transform_1(%arg0: i32) -> (i32, i32) {
    %c0_i32 = arith.constant 0 : i32
    %c0_i32_0 = arith.constant 0 : i32
    %c0_i32_1 = arith.constant 0 : i32
    return %c0_i32, %c0_i32_0 : i32, i32
  }
  func.func @transform_2(%arg0: i32) -> (i32, i32) {
    %c0_i32 = arith.constant 0 : i32
    %c0_i32_0 = arith.constant 0 : i32
    %c0_i32_1 = arith.constant 0 : i32
    return %c0_i32, %c0_i32_0 : i32, i32
  }
  func.func @transform_3(%arg0: i32) -> (i32, i32) {
    %c0_i32 = arith.constant 0 : i32
    %c0_i32_0 = arith.constant 0 : i32
    %c0_i32_1 = arith.constant 0 : i32
    return %c0_i32, %c0_i32_0 : i32, i32
  }
  func.func @transform_4(%arg0: i32) -> (i32, i32) {
    %c0_i32 = arith.constant 0 : i32
    %c0_i32_0 = arith.constant 0 : i32
    %c0_i32_1 = arith.constant 0 : i32
    return %c0_i32, %c0_i32_0 : i32, i32
  }
  func.func @transform_5(%arg0: i32) -> (i32, i32) {
    %c0_i32 = arith.constant 0 : i32
    %c0_i32_0 = arith.constant 0 : i32
    %c0_i32_1 = arith.constant 0 : i32
    return %c0_i32, %c0_i32_0 : i32, i32
  }
  func.func @transform_6(%arg0: i32) -> (i32, i32) {
    %c0_i32 = arith.constant 0 : i32
    %c0_i32_0 = arith.constant 0 : i32
    %c0_i32_1 = arith.constant 0 : i32
    return %c0_i32, %c0_i32_0 : i32, i32
  }
  func.func @transform_7(%arg0: i32) -> (i32, i32, i32) {
    %c0_i32 = arith.constant 0 : i32
    %c0_i32_0 = arith.constant 0 : i32
    %c0_i32_1 = arith.constant 0 : i32
    return %arg0, %c0_i32, %c0_i32_0 : i32, i32, i32
  }
}

</mosaic_0001>

<llo_original>
// kernel: tpu_custom_call.1
$region0: #{tpu_custom_call.1}
  #allocation0 [shape = 'u32[]', space=smem, size = 0x4, offset = 0x4, fixed_abs, tag = 'smem constant byte address 0x4 - core index']
  #allocation1 [shape = 'u32[144,128]{1,0:T(1,128)}', space=vmem, size = 0x12000, scoped, tag = 'internal scratch']
  #allocation2 [shape = 'f32[160,256]{1,0:T(8,128)}', space=vmem, size = 0x28000, scoped, tag = 'scratch operand']
  %s0 = inlined_call_operand.vmem [shape: f32[2,16,256], index: 0, kind: input, shape index: {}]
  %s1 = inlined_call_operand.vmem [shape: f32[16,1], index: 1, kind: input, shape index: {}]
  %s2 = inlined_call_operand.vmem [shape: f32[16,1], index: 2, kind: input, shape index: {}]
  %s3 = inlined_call_operand.vmem [shape: f32[16,1], index: 3, kind: input, shape index: {}]
  %s4 = inlined_call_operand.vmem [shape: f32[16,1], index: 4, kind: input, shape index: {}]
  %s5 = inlined_call_operand.hbm [shape: f32[16,144], index: 5, kind: input, shape index: {}]
  %s6 = inlined_call_operand.hbm [shape: f32[16,160], index: 6, kind: input, shape index: {}]
  %s7 = inlined_call_operand.hbm [shape: f32[2,16,256], index: 7, kind: output, shape index: {}]
  %s8 = sld [smem:[#allocation0]]
  $region69: #{tpu_custom_call.1} parent=0
    _
  %s10 = ssub.s32 1, %s8
  %s11 = scalar_select 0, %s10, %s8
  $region1: #{tpu_custom_call.1} parent=0
    #allocation3 [shape = 'u8[16384]{0}', space=vmem, size = 0x4000, scoped, tag = 'input window, operand 5, single buffered']
    #allocation4 [shape = 's32[2]{0}', space=sflag, size = 0x8, scoped, tag = 'scoped memory for tpu_custom_call.1']
    #allocation5 [shape = 's32[2]{0}', space=sflag, size = 0x8, scoped, tag = 'scoped memory for tpu_custom_call.1']
    #allocation6 [shape = 'u8[16384]{0}', space=vmem, size = 0x4000, scoped, tag = 'input window, operand 6, single buffered']
    #allocation7 [shape = 's32[1]{0}', space=sflag, size = 0x4, scoped, tag = 'scoped memory for tpu_custom_call.1']
    #allocation8 [shape = 'u8[32768]{0}', space=vmem, size = 0x8000, scoped, tag = 'output window, operand 0']
    %12 = vsyncpa [#allocation4], 0
    %13 = vsyncpa [#allocation7], 0
    %14 = vsyncpa [#allocation5], 0
    %s15 = scalar_lea.sflag [#allocation5], 1
    %16 = vsyncpa %s15, 0
    loop: start=0, step=1, limit=4
    $region2: #{tpu_custom_call.1} parent=1 // loop_pre_header
      _
    $region3: #{tpu_custom_call.1} parent=1 // loop_header
      %s18 = sphi 0, %s22
      %p19 = scmp.ge.s32.totalorder %s18, 4
      %s28 = sphi 0, %s30
      %s31 = sphi 0, %s28
      %s32 = sphi 0, %s31
      %s48 = sphi 0, %s32
      %s52 = sphi 0, %s52
      %s54 = sphi 0, %s52
      %s55 = sphi 0, %s54
      %s69 = sphi 0, %s55
      %s73 = sphi 0, %s73
      %s75 = sphi 0, %s73
      %s76 = sphi 0, %s75
      %s90 = sphi 0, %s76
      %s94 = sphi 0, %s94
      %s96 = sphi 0, %s94
      %s97 = sphi 0, %s96
      %s111 = sphi 0, %s97
      %s115 = sphi 0, %s115
      %s117 = sphi 0, %s115
      %s118 = sphi 0, %s117
      %s132 = sphi 0, %s118
      %s136 = sphi 0, %s136
      %s138 = sphi 0, %s136
      %s139 = sphi 0, %s138
      %s153 = sphi 0, %s139
      %s157 = sphi 0, %s157
      %s159 = sphi 0, %s157
      %s160 = sphi 0, %s159
      %s174 = sphi 0, %s160
      %s180 = sphi 0, %s182
      %s183 = sphi 0, %s180
      %s184 = sphi 0, %s183
      %s200 = sphi 0, %s184
    $region4: #{tpu_custom_call.1} parent=1 // loop_header_branch
      %21 = sbr.rel (%p19) target = $region8
    $region5: #{tpu_custom_call.1} parent=1 // loop_body
      %s23 = ssub.s32 %s18, 1
      %s24 = ssub.s32 %s18, 2
      %s25 = sadd.s32 %s18, 1
      %s26 = ssub.s32 %s18, %s25
      %p27 = scmp.eq.s32.totalorder %s26, 0
      %s29 = sadd.s32 %s28, 1
      %s30 = scalar_select %p27, %s28, %s29
      %p33 = pneg %p27
      %p34 = scmp.eq.s32.totalorder %s18, 1
      %p35 = por %p33, %p34
      %p36 = scmp.ne.s32.totalorder %s28, %s31
      %p37 = scmp.eq.s32.totalorder %s18, 0
      %p38 = por %p36, %p37
      %p39 = scmp.ne.s32.totalorder %s28, %s31
      %p40 = scmp.eq.s32.totalorder %s23, 1
      %p41 = por %p39, %p40
      %p42 = scmp.ne.s32.totalorder %s31, %s32
      %p43 = scmp.eq.s32.totalorder %s23, 0
      %p44 = por %p42, %p43
      %p45 = scmp.ne.s32.totalorder %s31, %s32
      %p46 = scmp.eq.s32.totalorder %s24, 1
      %p47 = por %p45, %p46
      %p49 = scmp.ne.s32.totalorder %s32, %s48
      %p50 = scmp.eq.s32.totalorder %s24, 0
      %p51 = por %p49, %p50
      %s53 = sadd.s32 %s52, 1
      %p56 = scmp.eq.s32.totalorder %s18, 1
      %p57 = scmp.ne.s32.totalorder %s52, %s54
      %p58 = scmp.eq.s32.totalorder %s18, 0
      %p59 = por %p57, %p58
      %p60 = scmp.ne.s32.totalorder %s52, %s54
      %p61 = scmp.eq.s32.totalorder %s23, 1
      %p62 = por %p60, %p61
      %p63 = scmp.ne.s32.totalorder %s54, %s55
      %p64 = scmp.eq.s32.totalorder %s23, 0
      %p65 = por %p63, %p64
      %p66 = scmp.ne.s32.totalorder %s54, %s55
      %p67 = scmp.eq.s32.totalorder %s24, 1
      %p68 = por %p66, %p67
      %p70 = scmp.ne.s32.totalorder %s55, %s69
      %p71 = scmp.eq.s32.totalorder %s24, 0
      %p72 = por %p70, %p71
      %s74 = sadd.s32 %s73, 1
      %p77 = scmp.eq.s32.totalorder %s18, 1
      %p78 = scmp.ne.s32.totalorder %s73, %s75
      %p79 = scmp.eq.s32.totalorder %s18, 0
      %p80 = por %p78, %p79
      %p81 = scmp.ne.s32.totalorder %s73, %s75
      %p82 = scmp.eq.s32.totalorder %s23, 1
      %p83 = por %p81, %p82
      %p84 = scmp.ne.s32.totalorder %s75, %s76
      %p85 = scmp.eq.s32.totalorder %s23, 0
      %p86 = por %p84, %p85
      %p87 = scmp.ne.s32.totalorder %s75, %s76
      %p88 = scmp.eq.s32.totalorder %s24, 1
      %p89 = por %p87, %p88
      %p91 = scmp.ne.s32.totalorder %s76, %s90
      %p92 = scmp.eq.s32.totalorder %s24, 0
      %p93 = por %p91, %p92
      %s95 = sadd.s32 %s94, 1
      %p98 = scmp.eq.s32.totalorder %s18, 1
      %p99 = scmp.ne.s32.totalorder %s94, %s96
      %p100 = scmp.eq.s32.totalorder %s18, 0
      %p101 = por %p99, %p100
      %p102 = scmp.ne.s32.totalorder %s94, %s96
      %p103 = scmp.eq.s32.totalorder %s23, 1
      %p104 = por %p102, %p103
      %p105 = scmp.ne.s32.totalorder %s96, %s97
      %p106 = scmp.eq.s32.totalorder %s23, 0
      %p107 = por %p105, %p106
      %p108 = scmp.ne.s32.totalorder %s96, %s97
      %p109 = scmp.eq.s32.totalorder %s24, 1
      %p110 = por %p108, %p109
      %p112 = scmp.ne.s32.totalorder %s97, %s111
      %p113 = scmp.eq.s32.totalorder %s24, 0
      %p114 = por %p112, %p113
      %s116 = sadd.s32 %s115, 1
      %p119 = scmp.eq.s32.totalorder %s18, 1
      %p120 = scmp.ne.s32.totalorder %s115, %s117
      %p121 = scmp.eq.s32.totalorder %s18, 0
      %p122 = por %p120, %p121
      %p123 = scmp.ne.s32.totalorder %s115, %s117
      %p124 = scmp.eq.s32.totalorder %s23, 1
      %p125 = por %p123, %p124
      %p126 = scmp.ne.s32.totalorder %s117, %s118
      %p127 = scmp.eq.s32.totalorder %s23, 0
      %p128 = por %p126, %p127
      %p129 = scmp.ne.s32.totalorder %s117, %s118
      %p130 = scmp.eq.s32.totalorder %s24, 1
      %p131 = por %p129, %p130
      %p133 = scmp.ne.s32.totalorder %s118, %s132
      %p134 = scmp.eq.s32.totalorder %s24, 0
      %p135 = por %p133, %p134
      %s137 = sadd.s32 %s136, 1
      %p140 = scmp.eq.s32.totalorder %s18, 1
      %p141 = scmp.ne.s32.totalorder %s136, %s138
      %p142 = scmp.eq.s32.totalorder %s18, 0
      %p143 = por %p141, %p142
      %p144 = scmp.ne.s32.totalorder %s136, %s138
      %p145 = scmp.eq.s32.totalorder %s23, 1
      %p146 = por %p144, %p145
      %p147 = scmp.ne.s32.totalorder %s138, %s139
      %p148 = scmp.eq.s32.totalorder %s23, 0
      %p149 = por %p147, %p148
      %p150 = scmp.ne.s32.totalorder %s138, %s139
      %p151 = scmp.eq.s32.totalorder %s24, 1
      %p152 = por %p150, %p151
      %p154 = scmp.ne.s32.totalorder %s139, %s153
      %p155 = scmp.eq.s32.totalorder %s24, 0
      %p156 = por %p154, %p155
      %s158 = sadd.s32 %s157, 1
      %p161 = scmp.eq.s32.totalorder %s18, 1
      %p162 = scmp.ne.s32.totalorder %s157, %s159
      %p163 = scmp.eq.s32.totalorder %s18, 0
      %p164 = por %p162, %p163
      %p165 = scmp.ne.s32.totalorder %s157, %s159
      %p166 = scmp.eq.s32.totalorder %s23, 1
      %p167 = por %p165, %p166
      %p168 = scmp.ne.s32.totalorder %s159, %s160
      %p169 = scmp.eq.s32.totalorder %s23, 0
      %p170 = por %p168, %p169
      %p171 = scmp.ne.s32.totalorder %s159, %s160
      %p172 = scmp.eq.s32.totalorder %s24, 1
      %p173 = por %p171, %p172
      %p175 = scmp.ne.s32.totalorder %s160, %s174
      %p176 = scmp.eq.s32.totalorder %s24, 0
      %p177 = por %p175, %p176
      %s178 = ssub.s32 %s18, %s25
      %p179 = scmp.eq.s32.totalorder %s178, 0
      %s181 = sadd.s32 %s180, 1
      %s182 = scalar_select %p179, %s180, %s181
      %p185 = pneg %p179
      %p186 = scmp.eq.s32.totalorder %s18, 1
      %p187 = por %p185, %p186
      %p188 = scmp.ne.s32.totalorder %s180, %s183
      %p189 = scmp.eq.s32.totalorder %s18, 0
      %p190 = por %p188, %p189
      %p191 = scmp.ne.s32.totalorder %s180, %s183
      %p192 = scmp.eq.s32.totalorder %s23, 1
      %p193 = por %p191, %p192
      %p194 = scmp.ne.s32.totalorder %s183, %s184
      %p195 = scmp.eq.s32.totalorder %s23, 0
      %p196 = por %p194, %p195
      %p197 = scmp.ne.s32.totalorder %s183, %s184
      %p198 = scmp.eq.s32.totalorder %s24, 1
      %p199 = por %p197, %p198
      %p201 = scmp.ne.s32.totalorder %s184, %s200
      %p202 = scmp.eq.s32.totalorder %s24, 0
      %p203 = por %p201, %p202
      %p204 = scmp.le.s32.totalorder 1, %s18
      %p205 = scmp.lt.s32.totalorder %s18, 3
      %p206 = pnand %p204, %p205
      %p207 = pneg %p206
      // Predicated region
      $region9: #{tpu_custom_call.1} parent=5 // pred_check
        _
      $region10: #{tpu_custom_call.1} parent=5 // pred_check_branch
        %209 = sbr.rel (%p206) target = $region12
      $region11: #{tpu_custom_call.1} parent=5 // pred_region
        %s210 = ssub.s32 %s18, 1
        // Predicated region
        $region13: #{tpu_custom_call.1} parent=11 // pred_check
          %p211 = pneg %p65
        $region14: #{tpu_custom_call.1} parent=11 // pred_check_branch
          %213 = sbr.rel (%p211) target = $region16
        $region15: #{tpu_custom_call.1} parent=11 // pred_region
          _
        $region16: #{tpu_custom_call.1} parent=11 // pred_fallthru
          _
        // Predicated region
        $region17: #{tpu_custom_call.1} parent=11 // pred_check
          %p214 = pneg %p86
        $region18: #{tpu_custom_call.1} parent=11 // pred_check_branch
          %216 = sbr.rel (%p214) target = $region20
        $region19: #{tpu_custom_call.1} parent=11 // pred_region
          _
        $region20: #{tpu_custom_call.1} parent=11 // pred_fallthru
          _
        // Predicated region
        $region21: #{tpu_custom_call.1} parent=11 // pred_check
          %p217 = pneg %p107
        $region22: #{tpu_custom_call.1} parent=11 // pred_check_branch
          %219 = sbr.rel (%p217) target = $region24
        $region23: #{tpu_custom_call.1} parent=11 // pred_region
          _
        $region24: #{tpu_custom_call.1} parent=11 // pred_fallthru
          _
        // Predicated region
        $region25: #{tpu_custom_call.1} parent=11 // pred_check
          %p220 = pneg %p128
        $region26: #{tpu_custom_call.1} parent=11 // pred_check_branch
          %222 = sbr.rel (%p220) target = $region28
        $region27: #{tpu_custom_call.1} parent=11 // pred_region
          _
        $region28: #{tpu_custom_call.1} parent=11 // pred_fallthru
          _
        // Predicated region
        $region29: #{tpu_custom_call.1} parent=11 // pred_check
          %p223 = pneg %p149
        $region30: #{tpu_custom_call.1} parent=11 // pred_check_branch
          %225 = sbr.rel (%p223) target = $region32
        $region31: #{tpu_custom_call.1} parent=11 // pred_region
          %s227 = ssub.s32 512, 512
          %228 = vsyncadd [#allocation4], %s227
          %s229 = sshll.u32 [#allocation3], 4
          %s230 = int_to_ptr.vmem [resolvable:$true] %s229
          %235 = dma.hbm_to_vmem [thread:$0]  %s5, 512, %s230, [#allocation4], 256, 256, 16
        $region32: #{tpu_custom_call.1} parent=11 // pred_fallthru
          _
        // Predicated region
        $region33: #{tpu_custom_call.1} parent=11 // pred_check
          %p236 = pneg %p170
        $region34: #{tpu_custom_call.1} parent=11 // pred_check_branch
          %238 = sbr.rel (%p236) target = $region36
        $region35: #{tpu_custom_call.1} parent=11 // pred_region
          %s240 = ssub.s32 512, 512
          %241 = vsyncadd [#allocation7], %s240
          %s242 = sshll.u32 [#allocation6], 4
          %s243 = int_to_ptr.vmem [resolvable:$true] %s242
          %248 = dma.hbm_to_vmem [thread:$0]  %s6, 512, %s243, [#allocation7], 256, 256, 16
        $region36: #{tpu_custom_call.1} parent=11 // pred_fallthru
          _
      $region12: #{tpu_custom_call.1} parent=5 // pred_fallthru
        _
      %p249 = scmp.lt.s32.totalorder %s18, 2
      // Predicated region
      $region37: #{tpu_custom_call.1} parent=5 // pred_check
        %p250 = pneg %p249
      $region38: #{tpu_custom_call.1} parent=5 // pred_check_branch
        %252 = sbr.rel (%p250) target = $region40
      $region39: #{tpu_custom_call.1} parent=5 // pred_region
        // Predicated region
        $region41: #{tpu_custom_call.1} parent=39 // pred_check
          %p253 = pneg %p38
        $region42: #{tpu_custom_call.1} parent=39 // pred_check_branch
          %255 = sbr.rel (%p253) target = $region44
        $region43: #{tpu_custom_call.1} parent=39 // pred_region
          %p256 = scmp.lt.s32.totalorder %s18, 1
          %s257 = scalar_select %p256, %s18, 1
          %s258 = smul.addr %s257, 4
          %s259 = smul.addr %s258, 8
          %s260 = scalar_lea.vmem %s0, %s259
        $region44: #{tpu_custom_call.1} parent=39 // pred_fallthru
          _
      $region40: #{tpu_custom_call.1} parent=5 // pred_fallthru
        _
      %p261 = scmp.le.s32.totalorder 1, %s18
      %p262 = scmp.lt.s32.totalorder %s18, 3
      %p263 = pnand %p261, %p262
      %p264 = pneg %p263
      // Predicated region
      $region45: #{tpu_custom_call.1} parent=5 // pred_check
        _
      $region46: #{tpu_custom_call.1} parent=5 // pred_check_branch
        %266 = sbr.rel (%p263) target = $region48
      $region47: #{tpu_custom_call.1} parent=5 // pred_region
        %s267 = ssub.s32 %s18, 1
        // Predicated region
        $region49: #{tpu_custom_call.1} parent=47 // pred_check
          %p268 = pneg %p149
        $region50: #{tpu_custom_call.1} parent=47 // pred_check_branch
          %270 = sbr.rel (%p268) target = $region52
        $region51: #{tpu_custom_call.1} parent=47 // pred_region
          %271 = dma.done [#allocation4], 512
        $region52: #{tpu_custom_call.1} parent=47 // pred_fallthru
          _
        // Predicated region
        $region53: #{tpu_custom_call.1} parent=47 // pred_check
          %p272 = pneg %p170
        $region54: #{tpu_custom_call.1} parent=47 // pred_check_branch
          %274 = sbr.rel (%p272) target = $region56
        $region55: #{tpu_custom_call.1} parent=47 // pred_region
          %275 = dma.done [#allocation7], 512
        $region56: #{tpu_custom_call.1} parent=47 // pred_fallthru
          _
        %p276 = scmp.lt.s32.totalorder %s23, 1
        %s277 = scalar_select %p276, %s23, 1
        %s278 = smul.addr %s277, 4
        %s279 = smul.addr %s278, 8
        %s280 = scalar_lea.vmem %s0, %s279
        %p281 = pneg %p44
        %p282 = pneg %p41
        %p283 = pneg %p65
        %p284 = pneg %p62
        %p285 = pneg %p86
        %p286 = pneg %p83
        %p287 = pneg %p107
        %p288 = pneg %p104
        %p289 = pneg %p128
        %p290 = pneg %p125
        %p291 = pneg %p149
        %p292 = pneg %p146
        %p293 = pneg %p170
        %p294 = pneg %p167
        %p295 = pneg %p196
        %p296 = pneg %p193
        %s297 = sand.u32 %s183, 1
        %s298 = scalar_lea.sflag [#allocation5], %s297
        %s299 = sand.u32 %s183, 1
        %s300 = smul.addr %s299, 32
        %s301 = scalar_lea.vmem [#allocation8], %s300
        %p302 = scmp.lt.s32.totalorder %s23, 1
        %s303 = scalar_select %p302, %s23, 1
        %s304 = smul.addr %s303, 4
        %s305 = smul.addr %s304, 8
        %s306 = scalar_lea.vmem %s0, %s305
        %v307 = vld [vmem:[%s306] sm:$0xff]
        %v308 = vld [vmem:[%s306 + $0x8] sm:$0xff]
        %v309 = vld [vmem:[%s306 + $0x10] sm:$0xff]
        %v310 = vld [vmem:[%s306 + $0x18] sm:$0xff]
        %v311 = vlaneseq
        %v312 = vand.u32 %v311, 127
        %v313 = vadd.s32 %v312, 128
        %vm314 = vcmp.lt.s32.totalorder %v312, 0
        %v315 = vsub.s32 0, %v312
        %v316 = vsel %vm314, %v315, %v312
        %v317 = vshrl.u32 %v316, 4
        %v318 = vand.u32 %v316, 15
        %v319 = vsub.s32 0, %v318
        %v320 = vsel %vm314, %v319, %v318
        %vm321 = vcmp.lt.s32.totalorder %v313, 0
        %v322 = vsub.s32 0, %v313
        %v323 = vsel %vm321, %v322, %v313
        %v324 = vshrl.u32 %v323, 4
        %v325 = vand.u32 %v323, 15
        %v326 = vsub.s32 0, %v325
        %v327 = vsel %vm321, %v326, %v325
        %vm328 = vcmp.ne.s32.totalorder %v320, 0
        %vm329 = vcmp.ne.s32.totalorder %v327, 0
        %vm330 = vcmp.lt.s32.totalorder %v320, 0
        %vm331 = vcmp.lt.s32.totalorder %v327, 0
        %vm332 = vmand %vm330, %vm328
        %vm333 = vmand %vm331, %vm329
        %v334 = vadd.s32 %v320, 16
        %v335 = vadd.s32 %v327, 16
        %v336 = vsel %vm332, %v334, %v320
        %v337 = vsel %vm333, %v335, %v327
        %vm338 = vcmp.ge.s32.totalorder %v312, 16
        %vm339 = vcmp.ge.s32.totalorder %v313, 16
        %vm340 = vcmp.lt.s32.totalorder %v312, 240
        %vm341 = vcmp.lt.s32.totalorder %v313, 240
        %vm342 = vcmp.ge.s32.totalorder %v336, 1
        %vm343 = vcmp.ge.s32.totalorder %v337, 1
        %vm344 = vcmp.le.s32.totalorder %v336, 14
        %vm345 = vcmp.le.s32.totalorder %v337, 14
        %vm346 = vmand %vm338, %vm342
        %vm347 = vmand %vm339, %vm343
        %vm348 = vmand %vm338, %vm344
        %vm349 = vmand %vm339, %vm345
        %vm350 = vmand %vm340, %vm342
        %vm351 = vmand %vm341, %vm343
        %vm352 = vmand %vm340, %vm344
        %vm353 = vmand %vm341, %vm345
        %354 = vst [vmem:[#allocation2 + $0x120] sm:$0xff] %v307
        %355 = vst [vmem:[#allocation2 + $0x128] sm:$0xff] %v308
        %356 = vst [vmem:[#allocation2 + $0x130] sm:$0xff] %v309
        %357 = vst [vmem:[#allocation2 + $0x138] sm:$0xff] %v310
        %v358 = vld [vmem:[%s1] sm:$0xff]
        %v359 = vld [vmem:[%s1 + $0x8] sm:$0xff]
        %v360 = vld [vmem:[%s2] sm:$0xff]
        %v361 = vld [vmem:[%s2 + $0x8] sm:$0xff]
        %v366 = vcombine.low %v307, %v308
        %v367 = vcombine.high %v307, %v308
        %v369 = vunpack.c.l.s4 1983009808
        %v370 = vunpack.c.0.s8 %v369
        %v371 = vlaneseq
        %v372 = vshrl.u32 %v371, 7
        %v373 = vsub.s32 %v370, %v372
        %v374 = vrot.slane %v366, %v373
        %v376 = vunpack.c.l.s4 1983009808
        %v377 = vunpack.c.0.s8 %v376
        %v378 = vlaneseq
        %v379 = vshrl.u32 %v378, 7
        %v380 = vsub.s32 %v377, %v379
        %v381 = vrot.slane %v367, %v380
        %v382 = vcombine.high %v374, %v374
        %v383 = vcombine.high %v381, %v381
        %v384 = vcombine.low %v309, %v310
        %v385 = vcombine.high %v309, %v310
        %v387 = vunpack.c.l.s4 1983009808
        %v388 = vunpack.c.0.s8 %v387
        %v389 = vlaneseq
        %v390 = vshrl.u32 %v389, 7
        %v391 = vsub.s32 %v388, %v390
        %v392 = vrot.slane %v384, %v391
        %v394 = vunpack.c.l.s4 1983009808
        %v395 = vunpack.c.0.s8 %v394
        %v396 = vlaneseq
        %v397 = vshrl.u32 %v396, 7
        %v398 = vsub.s32 %v395, %v397
        %v399 = vrot.slane %v385, %v398
        %v400 = vcombine.high %v392, %v392
        %v401 = vcombine.high %v399, %v399
        %v403 = vunpack.c.l.s4 1983009808
        %v404 = vunpack.c.0.s8 %v403
        %v405 = vlaneseq
        %v406 = vshrl.u32 %v405, 7
        %v407 = vsub.s32 %v404, %v406
        %v408 = vrot.slane %v374, %v407
        %v409 = vcombine.high %v408, %v408
        %v411 = vunpack.c.l.s4 1983009808
        %v412 = vunpack.c.0.s8 %v411
        %v413 = vlaneseq
        %v414 = vshrl.u32 %v413, 7
        %v415 = vsub.s32 %v412, %v414
        %v416 = vrot.slane %v382, %v415
        %v417 = vcombine.high %v416, %v416
        %v419 = vunpack.c.l.s4 1983009808
        %v420 = vunpack.c.0.s8 %v419
        %v421 = vlaneseq
        %v422 = vshrl.u32 %v421, 7
        %v423 = vsub.s32 %v420, %v422
        %v424 = vrot.slane %v381, %v423
        %v425 = vcombine.high %v424, %v424
        %v427 = vunpack.c.l.s4 1983009808
        %v428 = vunpack.c.0.s8 %v427
        %v429 = vlaneseq
        %v430 = vshrl.u32 %v429, 7
        %v431 = vsub.s32 %v428, %v430
        %v432 = vrot.slane %v383, %v431
        %v433 = vcombine.high %v432, %v432
        %v435 = vunpack.c.l.s4 1983009808
        %v436 = vunpack.c.0.s8 %v435
        %v437 = vlaneseq
        %v438 = vshrl.u32 %v437, 7
        %v439 = vsub.s32 %v436, %v438
        %v440 = vrot.slane %v392, %v439
        %v441 = vcombine.high %v440, %v440
        %v443 = vunpack.c.l.s4 1983009808
        %v444 = vunpack.c.0.s8 %v443
        %v445 = vlaneseq
        %v446 = vshrl.u32 %v445, 7
        %v447 = vsub.s32 %v444, %v446
        %v448 = vrot.slane %v400, %v447
        %v449 = vcombine.high %v448, %v448
        %v451 = vunpack.c.l.s4 1983009808
        %v452 = vunpack.c.0.s8 %v451
        %v453 = vlaneseq
        %v454 = vshrl.u32 %v453, 7
        %v455 = vsub.s32 %v452, %v454
        %v456 = vrot.slane %v399, %v455
        %v457 = vcombine.high %v456, %v456
        %v459 = vunpack.c.l.s4 1983009808
        %v460 = vunpack.c.0.s8 %v459
        %v461 = vlaneseq
        %v462 = vshrl.u32 %v461, 7
        %v463 = vsub.s32 %v460, %v462
        %v464 = vrot.slane %v401, %v463
        %v465 = vcombine.high %v464, %v464
        %vm482 = vcmask 1041408
        %v483 = vsel %vm482, %v408, 0.0
        %v484 = vsel %vm482, %v409, 0.0
        %v485 = vadd.f32 %v483, %v484
        %486 = vadd.xlane.f32.xlu0 %v485
        %v487 = vpop.xlane.xlu0 %486
        %v488 = vsel %vm482, %v416, 0.0
        %v489 = vsel %vm482, %v417, 0.0
        %v490 = vadd.f32 %v488, %v489
        %491 = vadd.xlane.f32.xlu0 %v490
        %v492 = vpop.xlane.xlu0 %491
        %v493 = vsel %vm482, %v424, 0.0
        %v494 = vsel %vm482, %v425, 0.0
        %v495 = vadd.f32 %v493, %v494
        %496 = vadd.xlane.f32.xlu0 %v495
        %v497 = vpop.xlane.xlu0 %496
        %v498 = vsel %vm482, %v432, 0.0
        %v499 = vsel %vm482, %v433, 0.0
        %v500 = vadd.f32 %v498, %v499
        %501 = vadd.xlane.f32.xlu0 %v500
        %v502 = vpop.xlane.xlu0 %501
        %v503 = vsel %vm482, %v440, 0.0
        %v504 = vsel %vm482, %v441, 0.0
        %v505 = vadd.f32 %v503, %v504
        %506 = vadd.xlane.f32.xlu0 %v505
        %v507 = vpop.xlane.xlu0 %506
        %v508 = vsel %vm482, %v448, 0.0
        %v509 = vsel %vm482, %v449, 0.0
        %v510 = vadd.f32 %v508, %v509
        %511 = vadd.xlane.f32.xlu0 %v510
        %v512 = vpop.xlane.xlu0 %511
        %v513 = vsel %vm482, %v456, 0.0
        %v514 = vsel %vm482, %v457, 0.0
        %v515 = vadd.f32 %v513, %v514
        %516 = vadd.xlane.f32.xlu0 %v515
        %v517 = vpop.xlane.xlu0 %516
        %v518 = vsel %vm482, %v464, 0.0
        %v519 = vsel %vm482, %v465, 0.0
        %v520 = vadd.f32 %v518, %v519
        %521 = vadd.xlane.f32.xlu0 %v520
        %v522 = vpop.xlane.xlu0 %521
        %v523 = vsel %vm482, %v487, 0.0
        %v524 = vrot.slane %v523, 4
        %v525 = vadd.f32 %v523, %v524
        %v526 = vrot.slane %v525, 2
        %v527 = vadd.f32 %v525, %v526
        %v528 = vrot.slane %v527, 1
        %v529 = vadd.f32 %v527, %v528
        %v530 = vsel %vm482, %v492, 0.0
        %v531 = vrot.slane %v530, 4
        %v532 = vadd.f32 %v530, %v531
        %v533 = vrot.slane %v532, 2
        %v534 = vadd.f32 %v532, %v533
        %v535 = vrot.slane %v534, 1
        %v536 = vadd.f32 %v534, %v535
        %v537 = vsel %vm482, %v497, 0.0
        %v538 = vrot.slane %v537, 4
        %v539 = vadd.f32 %v537, %v538
        %v540 = vrot.slane %v539, 2
        %v541 = vadd.f32 %v539, %v540
        %v542 = vrot.slane %v541, 1
        %v543 = vadd.f32 %v541, %v542
        %v544 = vsel %vm482, %v502, 0.0
        %v545 = vrot.slane %v544, 4
        %v546 = vadd.f32 %v544, %v545
        %v547 = vrot.slane %v546, 2
        %v548 = vadd.f32 %v546, %v547
        %v549 = vrot.slane %v548, 1
        %v550 = vadd.f32 %v548, %v549
        %v551 = vsel %vm482, %v507, 0.0
        %v552 = vrot.slane %v551, 4
        %v553 = vadd.f32 %v551, %v552
        %v554 = vrot.slane %v553, 2
        %v555 = vadd.f32 %v553, %v554
        %v556 = vrot.slane %v555, 1
        %v557 = vadd.f32 %v555, %v556
        %v558 = vsel %vm482, %v512, 0.0
        %v559 = vrot.slane %v558, 4
        %v560 = vadd.f32 %v558, %v559
        %v561 = vrot.slane %v560, 2
        %v562 = vadd.f32 %v560, %v561
        %v563 = vrot.slane %v562, 1
        %v564 = vadd.f32 %v562, %v563
        %v565 = vsel %vm482, %v517, 0.0
        %v566 = vrot.slane %v565, 4
        %v567 = vadd.f32 %v565, %v566
        %v568 = vrot.slane %v567, 2
        %v569 = vadd.f32 %v567, %v568
        %v570 = vrot.slane %v569, 1
        %v571 = vadd.f32 %v569, %v570
        %v572 = vsel %vm482, %v522, 0.0
        %v573 = vrot.slane %v572, 4
        %v574 = vadd.f32 %v572, %v573
        %v575 = vrot.slane %v574, 2
        %v576 = vadd.f32 %v574, %v575
        %v577 = vrot.slane %v576, 1
        %v578 = vadd.f32 %v576, %v577
        %v579 = vrcp.pop 512.0
        %v580 = vmul.f32 %v529, %v579
        %v581 = vmul.f32 %v536, %v579
        %v582 = vmul.f32 %v543, %v579
        %v583 = vmul.f32 %v550, %v579
        %v584 = vmul.f32 %v557, %v579
        %v585 = vmul.f32 %v564, %v579
        %v586 = vmul.f32 %v571, %v579
        %v587 = vmul.f32 %v578, %v579
        %v596 = vcombine.low %v580, %v581
        %v597 = vcombine.low %v582, %v583
        %v599 = vunpack.c.l.s4 1983009808
        %v600 = vunpack.c.0.s8 %v599
        %v601 = vlaneseq
        %v602 = vshrl.u32 %v601, 7
        %v603 = vsub.s32 %v600, %v602
        %v604 = vrot.slane %v596, %v603
        %v606 = vunpack.c.l.s4 1983009808
        %v607 = vunpack.c.0.s8 %v606
        %v608 = vlaneseq
        %v609 = vshrl.u32 %v608, 7
        %v610 = vsub.s32 %v607, %v609
        %v611 = vrot.slane %v597, %v610
        %v612 = vcombine.low %v604, %v611
        %v613 = vcombine.high %v604, %v611
        %v614 = vcombine.low %v584, %v585
        %v615 = vcombine.low %v586, %v587
        %v617 = vunpack.c.l.s4 1983009808
        %v618 = vunpack.c.0.s8 %v617
        %v619 = vlaneseq
        %v620 = vshrl.u32 %v619, 7
        %v621 = vsub.s32 %v618, %v620
        %v622 = vrot.slane %v614, %v621
        %v624 = vunpack.c.l.s4 1983009808
        %v625 = vunpack.c.0.s8 %v624
        %v626 = vlaneseq
        %v627 = vshrl.u32 %v626, 7
        %v628 = vsub.s32 %v625, %v627
        %v629 = vrot.slane %v615, %v628
        %v630 = vcombine.low %v622, %v629
        %v631 = vcombine.high %v622, %v629
        %v636 = vsub.f32 %v307, %v612
        %v637 = vsub.f32 %v308, %v613
        %v638 = vsub.f32 %v309, %v630
        %v639 = vsub.f32 %v310, %v631
        %v640 = vmul.f32 %v636, %v636
        %v641 = vmul.f32 %v637, %v637
        %v642 = vmul.f32 %v638, %v638
        %v643 = vmul.f32 %v639, %v639
        %v648 = vcombine.low %v640, %v641
        %v649 = vcombine.high %v640, %v641
        %v651 = vunpack.c.l.s4 1983009808
        %v652 = vunpack.c.0.s8 %v651
        %v653 = vlaneseq
        %v654 = vshrl.u32 %v653, 7
        %v655 = vsub.s32 %v652, %v654
        %v656 = vrot.slane %v648, %v655
        %v658 = vunpack.c.l.s4 1983009808
        %v659 = vunpack.c.0.s8 %v658
        %v660 = vlaneseq
        %v661 = vshrl.u32 %v660, 7
        %v662 = vsub.s32 %v659, %v661
        %v663 = vrot.slane %v649, %v662
        %v664 = vcombine.high %v656, %v656
        %v665 = vcombine.high %v663, %v663
        %v666 = vcombine.low %v642, %v643
        %v667 = vcombine.high %v642, %v643
        %v669 = vunpack.c.l.s4 1983009808
        %v670 = vunpack.c.0.s8 %v669
        %v671 = vlaneseq
        %v672 = vshrl.u32 %v671, 7
        %v673 = vsub.s32 %v670, %v672
        %v674 = vrot.slane %v666, %v673
        %v676 = vunpack.c.l.s4 1983009808
        %v677 = vunpack.c.0.s8 %v676
        %v678 = vlaneseq
        %v679 = vshrl.u32 %v678, 7
        %v680 = vsub.s32 %v677, %v679
        %v681 = vrot.slane %v667, %v680
        %v682 = vcombine.high %v674, %v674
        %v683 = vcombine.high %v681, %v681
        %v685 = vunpack.c.l.s4 1983009808
        %v686 = vunpack.c.0.s8 %v685
        %v687 = vlaneseq
        %v688 = vshrl.u32 %v687, 7
        %v689 = vsub.s32 %v686, %v688
        %v690 = vrot.slane %v656, %v689
        %v691 = vcombine.high %v690, %v690
        %v693 = vunpack.c.l.s4 1983009808
        %v694 = vunpack.c.0.s8 %v693
        %v695 = vlaneseq
        %v696 = vshrl.u32 %v695, 7
        %v697 = vsub.s32 %v694, %v696
        %v698 = vrot.slane %v664, %v697
        %v699 = vcombine.high %v698, %v698
        %v701 = vunpack.c.l.s4 1983009808
        %v702 = vunpack.c.0.s8 %v701
        %v703 = vlaneseq
        %v704 = vshrl.u32 %v703, 7
        %v705 = vsub.s32 %v702, %v704
        %v706 = vrot.slane %v663, %v705
        %v707 = vcombine.high %v706, %v706
        %v709 = vunpack.c.l.s4 1983009808
        %v710 = vunpack.c.0.s8 %v709
        %v711 = vlaneseq
        %v712 = vshrl.u32 %v711, 7
        %v713 = vsub.s32 %v710, %v712
        %v714 = vrot.slane %v665, %v713
        %v715 = vcombine.high %v714, %v714
        %v717 = vunpack.c.l.s4 1983009808
        %v718 = vunpack.c.0.s8 %v717
        %v719 = vlaneseq
        %v720 = vshrl.u32 %v719, 7
        %v721 = vsub.s32 %v718, %v720
        %v722 = vrot.slane %v674, %v721
        %v723 = vcombine.high %v722, %v722
        %v725 = vunpack.c.l.s4 1983009808
        %v726 = vunpack.c.0.s8 %v725
        %v727 = vlaneseq
        %v728 = vshrl.u32 %v727, 7
        %v729 = vsub.s32 %v726, %v728
        %v730 = vrot.slane %v682, %v729
        %v731 = vcombine.high %v730, %v730
        %v733 = vunpack.c.l.s4 1983009808
        %v734 = vunpack.c.0.s8 %v733
        %v735 = vlaneseq
        %v736 = vshrl.u32 %v735, 7
        %v737 = vsub.s32 %v734, %v736
        %v738 = vrot.slane %v681, %v737
        %v739 = vcombine.high %v738, %v738
        %v741 = vunpack.c.l.s4 1983009808
        %v742 = vunpack.c.0.s8 %v741
        %v743 = vlaneseq
        %v744 = vshrl.u32 %v743, 7
        %v745 = vsub.s32 %v742, %v744
        %v746 = vrot.slane %v683, %v745
        %v747 = vcombine.high %v746, %v746
        %v764 = vsel %vm482, %v690, 0.0
        %v765 = vsel %vm482, %v691, 0.0
        %v766 = vadd.f32 %v764, %v765
        %767 = vadd.xlane.f32.xlu0 %v766
        %v768 = vpop.xlane.xlu0 %767
        %v769 = vsel %vm482, %v698, 0.0
        %v770 = vsel %vm482, %v699, 0.0
        %v771 = vadd.f32 %v769, %v770
        %772 = vadd.xlane.f32.xlu0 %v771
        %v773 = vpop.xlane.xlu0 %772
        %v774 = vsel %vm482, %v706, 0.0
        %v775 = vsel %vm482, %v707, 0.0
        %v776 = vadd.f32 %v774, %v775
        %777 = vadd.xlane.f32.xlu0 %v776
        %v778 = vpop.xlane.xlu0 %777
        %v779 = vsel %vm482, %v714, 0.0
        %v780 = vsel %vm482, %v715, 0.0
        %v781 = vadd.f32 %v779, %v780
        %782 = vadd.xlane.f32.xlu0 %v781
        %v783 = vpop.xlane.xlu0 %782
        %v784 = vsel %vm482, %v722, 0.0
        %v785 = vsel %vm482, %v723, 0.0
        %v786 = vadd.f32 %v784, %v785
        %787 = vadd.xlane.f32.xlu0 %v786
        %v788 = vpop.xlane.xlu0 %787
        %v789 = vsel %vm482, %v730, 0.0
        %v790 = vsel %vm482, %v731, 0.0
        %v791 = vadd.f32 %v789, %v790
        %792 = vadd.xlane.f32.xlu0 %v791
        %v793 = vpop.xlane.xlu0 %792
        %v794 = vsel %vm482, %v738, 0.0
        %v795 = vsel %vm482, %v739, 0.0
        %v796 = vadd.f32 %v794, %v795
        %797 = vadd.xlane.f32.xlu0 %v796
        %v798 = vpop.xlane.xlu0 %797
        %v799 = vsel %vm482, %v746, 0.0
        %v800 = vsel %vm482, %v747, 0.0
        %v801 = vadd.f32 %v799, %v800
        %802 = vadd.xlane.f32.xlu0 %v801
        %v803 = vpop.xlane.xlu0 %802
        %v804 = vsel %vm482, %v768, 0.0
        %v805 = vrot.slane %v804, 4
        %v806 = vadd.f32 %v804, %v805
        %v807 = vrot.slane %v806, 2
        %v808 = vadd.f32 %v806, %v807
        %v809 = vrot.slane %v808, 1
        %v810 = vadd.f32 %v808, %v809
        %v811 = vsel %vm482, %v773, 0.0
        %v812 = vrot.slane %v811, 4
        %v813 = vadd.f32 %v811, %v812
        %v814 = vrot.slane %v813, 2
        %v815 = vadd.f32 %v813, %v814
        %v816 = vrot.slane %v815, 1
        %v817 = vadd.f32 %v815, %v816
        %v818 = vsel %vm482, %v778, 0.0
        %v819 = vrot.slane %v818, 4
        %v820 = vadd.f32 %v818, %v819
        %v821 = vrot.slane %v820, 2
        %v822 = vadd.f32 %v820, %v821
        %v823 = vrot.slane %v822, 1
        %v824 = vadd.f32 %v822, %v823
        %v825 = vsel %vm482, %v783, 0.0
        %v826 = vrot.slane %v825, 4
        %v827 = vadd.f32 %v825, %v826
        %v828 = vrot.slane %v827, 2
        %v829 = vadd.f32 %v827, %v828
        %v830 = vrot.slane %v829, 1
        %v831 = vadd.f32 %v829, %v830
        %v832 = vsel %vm482, %v788, 0.0
        %v833 = vrot.slane %v832, 4
        %v834 = vadd.f32 %v832, %v833
        %v835 = vrot.slane %v834, 2
        %v836 = vadd.f32 %v834, %v835
        %v837 = vrot.slane %v836, 1
        %v838 = vadd.f32 %v836, %v837
        %v839 = vsel %vm482, %v793, 0.0
        %v840 = vrot.slane %v839, 4
        %v841 = vadd.f32 %v839, %v840
        %v842 = vrot.slane %v841, 2
        %v843 = vadd.f32 %v841, %v842
        %v844 = vrot.slane %v843, 1
        %v845 = vadd.f32 %v843, %v844
        %v846 = vsel %vm482, %v798, 0.0
        %v847 = vrot.slane %v846, 4
        %v848 = vadd.f32 %v846, %v847
        %v849 = vrot.slane %v848, 2
        %v850 = vadd.f32 %v848, %v849
        %v851 = vrot.slane %v850, 1
        %v852 = vadd.f32 %v850, %v851
        %v853 = vsel %vm482, %v803, 0.0
        %v854 = vrot.slane %v853, 4
        %v855 = vadd.f32 %v853, %v854
        %v856 = vrot.slane %v855, 2
        %v857 = vadd.f32 %v855, %v856
        %v858 = vrot.slane %v857, 1
        %v859 = vadd.f32 %v857, %v858
        %v860 = vmul.f32 %v810, %v579
        %v861 = vmul.f32 %v817, %v579
        %v862 = vmul.f32 %v824, %v579
        %v863 = vmul.f32 %v831, %v579
        %v864 = vmul.f32 %v838, %v579
        %v865 = vmul.f32 %v845, %v579
        %v866 = vmul.f32 %v852, %v579
        %v867 = vmul.f32 %v859, %v579
        %v868 = vadd.f32 %v860, 1e-05
        %v869 = vadd.f32 %v861, 1e-05
        %v870 = vadd.f32 %v862, 1e-05
        %v871 = vadd.f32 %v863, 1e-05
        %v872 = vadd.f32 %v864, 1e-05
        %v873 = vadd.f32 %v865, 1e-05
        %v874 = vadd.f32 %v866, 1e-05
        %v875 = vadd.f32 %v867, 1e-05
        %v876 = vrsqrt.pop %v868
        %v877 = vrsqrt.pop %v869
        %v878 = vrsqrt.pop %v870
        %v879 = vrsqrt.pop %v871
        %v880 = vrsqrt.pop %v872
        %v881 = vrsqrt.pop %v873
        %v882 = vrsqrt.pop %v874
        %v883 = vrsqrt.pop %v875
        %v892 = vcombine.low %v876, %v877
        %v893 = vcombine.low %v878, %v879
        %v895 = vunpack.c.l.s4 1983009808
        %v896 = vunpack.c.0.s8 %v895
        %v897 = vlaneseq
        %v898 = vshrl.u32 %v897, 7
        %v899 = vsub.s32 %v896, %v898
        %v900 = vrot.slane %v892, %v899
        %v902 = vunpack.c.l.s4 1983009808
        %v903 = vunpack.c.0.s8 %v902
        %v904 = vlaneseq
        %v905 = vshrl.u32 %v904, 7
        %v906 = vsub.s32 %v903, %v905
        %v907 = vrot.slane %v893, %v906
        %v908 = vcombine.low %v900, %v907
        %v909 = vcombine.high %v900, %v907
        %v910 = vcombine.low %v880, %v881
        %v911 = vcombine.low %v882, %v883
        %v913 = vunpack.c.l.s4 1983009808
        %v914 = vunpack.c.0.s8 %v913
        %v915 = vlaneseq
        %v916 = vshrl.u32 %v915, 7
        %v917 = vsub.s32 %v914, %v916
        %v918 = vrot.slane %v910, %v917
        %v920 = vunpack.c.l.s4 1983009808
        %v921 = vunpack.c.0.s8 %v920
        %v922 = vlaneseq
        %v923 = vshrl.u32 %v922, 7
        %v924 = vsub.s32 %v921, %v923
        %v925 = vrot.slane %v911, %v924
        %v926 = vcombine.low %v918, %v925
        %v927 = vcombine.high %v918, %v925
        %v932 = vmul.f32 %v636, %v908
        %v933 = vmul.f32 %v637, %v909
        %v934 = vmul.f32 %v638, %v926
        %v935 = vmul.f32 %v639, %v927
        %937 = vset.pattern.permute.xlu0 0
        %938 = vperm.xlu0 %937, %v358
        %v939 = vpop.permute.xlu0 %938
        %942 = vset.pattern.permute.xlu0 0
        %943 = vperm.xlu0 %942, %v359
        %v944 = vpop.permute.xlu0 %943
        %v946 = vmul.f32 %v932, %v939
        %v947 = vmul.f32 %v933, %v939
        %v948 = vmul.f32 %v934, %v944
        %v949 = vmul.f32 %v935, %v944
        %951 = vset.pattern.permute.xlu0 0
        %952 = vperm.xlu0 %951, %v360
        %v953 = vpop.permute.xlu0 %952
        %956 = vset.pattern.permute.xlu0 0
        %957 = vperm.xlu0 %956, %v361
        %v958 = vpop.permute.xlu0 %957
        %v960 = vadd.f32 %v946, %v953
        %v961 = vadd.f32 %v947, %v953
        %v962 = vadd.f32 %v948, %v958
        %v963 = vadd.f32 %v949, %v958
        %v964 = vxor.u32 %v960, 2147483648
        %v965 = vxor.u32 %v961, 2147483648
        %v966 = vxor.u32 %v962, 2147483648
        %v967 = vxor.u32 %v963, 2147483648
        %v968 = vmul.f32 %v964, 1.442695
        %v969 = vpow.pop %v968
        %v970 = vmul.f32 %v965, 1.442695
        %v971 = vpow.pop %v970
        %v972 = vmul.f32 %v966, 1.442695
        %v973 = vpow.pop %v972
        %v974 = vmul.f32 %v967, 1.442695
        %v975 = vpow.pop %v974
        %v976 = vadd.f32 %v969, 1.0
        %v977 = vadd.f32 %v971, 1.0
        %v978 = vadd.f32 %v973, 1.0
        %v979 = vadd.f32 %v975, 1.0
        %v980 = vrcp.pop %v976
        %v981 = vmul.f32 1.0, %v980
        %v982 = vrcp.pop %v977
        %v983 = vmul.f32 1.0, %v982
        %v984 = vrcp.pop %v978
        %v985 = vmul.f32 1.0, %v984
        %v986 = vrcp.pop %v979
        %v987 = vmul.f32 1.0, %v986
        %v988 = vmul.f32 %v960, %v981
        %v989 = vmul.f32 %v961, %v983
        %v990 = vmul.f32 %v962, %v985
        %v991 = vmul.f32 %v963, %v987
        %992 = vrot.lane.b32.xlu0 %v988, 17
        %v993 = vpop.permute.xlu0 %992
        %994 = vrot.lane.b32.xlu0 %v990, 17
        %v995 = vpop.permute.xlu0 %994
        %996 = vrot.lane.b32.xlu0 %v989, 17
        %v997 = vpop.permute.xlu0 %996
        %998 = vrot.lane.b32.xlu0 %v991, 17
        %v999 = vpop.permute.xlu0 %998
        %vm1000 = vcmp.lt.s32.totalorder %v312, 17
        %v1001 = vsel %vm1000, %v993, %v997
        %v1002 = vsel %vm1000, %v995, %v999
        %v1003 = vsel %vm1000, %v997, %v993
        %v1004 = vsel %vm1000, %v999, %v995
        %v1005 = vsel %vm346, 1, 0
        %v1006 = vsel %vm347, 1, 0
        %vm1007 = vcmp.eq.s32.totalorder %v1005, 1
        %vm1008 = vcmp.eq.s32.totalorder %v1006, 1
        %v1009 = vsel %vm1007, %v1003, 0.0
        %v1010 = vsel %vm1008, %v1001, 0.0
        %v1011 = vsel %vm1007, %v1004, 0.0
        %v1012 = vsel %vm1008, %v1002, 0.0
        %1013 = vst [vmem:[#allocation2] sm:$0xff] %v1009
        %1014 = vst [vmem:[#allocation2 + $0x8] sm:$0xff] %v1010
        %1015 = vst [vmem:[#allocation2 + $0x10] sm:$0xff] %v1011
        %1016 = vst [vmem:[#allocation2 + $0x18] sm:$0xff] %v1012
        %1017 = vrot.lane.b32.xlu0 %v988, 16
        %v1018 = vpop.permute.xlu0 %1017
        %1019 = vrot.lane.b32.xlu0 %v990, 16
        %v1020 = vpop.permute.xlu0 %1019
        %1021 = vrot.lane.b32.xlu0 %v989, 16
        %v1022 = vpop.permute.xlu0 %1021
        %1023 = vrot.lane.b32.xlu0 %v991, 16
        %v1024 = vpop.permute.xlu0 %1023
        %vm1025 = vcmp.lt.s32.totalorder %v312, 16
        %v1026 = vsel %vm1025, %v1018, %v1022
        %v1027 = vsel %vm1025, %v1020, %v1024
        %v1028 = vsel %vm1025, %v1022, %v1018
        %v1029 = vsel %vm1025, %v1024, %v1020
        %v1030 = vsel %vm338, 1, 0
        %v1031 = vsel %vm339, 1, 0
        %vm1032 = vcmp.eq.s32.totalorder %v1030, 1
        %vm1033 = vcmp.eq.s32.totalorder %v1031, 1
        %v1034 = vsel %vm1032, %v1028, 0.0
        %v1035 = vsel %vm1033, %v1026, 0.0
        %v1036 = vsel %vm1032, %v1029, 0.0
        %v1037 = vsel %vm1033, %v1027, 0.0
        %1038 = vst [vmem:[#allocation2 + $0x20] sm:$0xff] %v1034
        %1039 = vst [vmem:[#allocation2 + $0x28] sm:$0xff] %v1035
        %1040 = vst [vmem:[#allocation2 + $0x30] sm:$0xff] %v1036
        %1041 = vst [vmem:[#allocation2 + $0x38] sm:$0xff] %v1037
        %1042 = vrot.lane.b32.xlu0 %v988, 15
        %v1043 = vpop.permute.xlu0 %1042
        %1044 = vrot.lane.b32.xlu0 %v990, 15
        %v1045 = vpop.permute.xlu0 %1044
        %1046 = vrot.lane.b32.xlu0 %v989, 15
        %v1047 = vpop.permute.xlu0 %1046
        %1048 = vrot.lane.b32.xlu0 %v991, 15
        %v1049 = vpop.permute.xlu0 %1048
        %vm1050 = vcmp.lt.s32.totalorder %v312, 15
        %v1051 = vsel %vm1050, %v1043, %v1047
        %v1052 = vsel %vm1050, %v1045, %v1049
        %v1053 = vsel %vm1050, %v1047, %v1043
        %v1054 = vsel %vm1050, %v1049, %v1045
        %v1055 = vsel %vm348, 1, 0
        %v1056 = vsel %vm349, 1, 0
        %vm1057 = vcmp.eq.s32.totalorder %v1055, 1
        %vm1058 = vcmp.eq.s32.totalorder %v1056, 1
        %v1059 = vsel %vm1057, %v1053, 0.0
        %v1060 = vsel %vm1058, %v1051, 0.0
        %v1061 = vsel %vm1057, %v1054, 0.0
        %v1062 = vsel %vm1058, %v1052, 0.0
        %1063 = vst [vmem:[#allocation2 + $0x40] sm:$0xff] %v1059
        %1064 = vst [vmem:[#allocation2 + $0x48] sm:$0xff] %v1060
        %1065 = vst [vmem:[#allocation2 + $0x50] sm:$0xff] %v1061
        %1066 = vst [vmem:[#allocation2 + $0x58] sm:$0xff] %v1062
        %1067 = vrot.lane.b32.xlu0 %v988, 1
        %v1068 = vpop.permute.xlu0 %1067
        %1069 = vrot.lane.b32.xlu0 %v990, 1
        %v1070 = vpop.permute.xlu0 %1069
        %1071 = vrot.lane.b32.xlu0 %v989, 1
        %v1072 = vpop.permute.xlu0 %1071
        %1073 = vrot.lane.b32.xlu0 %v991, 1
        %v1074 = vpop.permute.xlu0 %1073
        %vm1075 = vcmp.lt.s32.totalorder %v312, 1
        %v1076 = vsel %vm1075, %v1068, %v1072
        %v1077 = vsel %vm1075, %v1070, %v1074
        %v1078 = vsel %vm1075, %v1072, %v1068
        %v1079 = vsel %vm1075, %v1074, %v1070
        %v1080 = vsel %vm342, 1, 0
        %v1081 = vsel %vm343, 1, 0
        %vm1082 = vcmp.eq.s32.totalorder %v1080, 1
        %vm1083 = vcmp.eq.s32.totalorder %v1081, 1
        %v1084 = vsel %vm1082, %v1078, 0.0
        %v1085 = vsel %vm1083, %v1076, 0.0
        %v1086 = vsel %vm1082, %v1079, 0.0
        %v1087 = vsel %vm1083, %v1077, 0.0
        %1088 = vst [vmem:[#allocation2 + $0x60] sm:$0xff] %v1084
        %1089 = vst [vmem:[#allocation2 + $0x68] sm:$0xff] %v1085
        %1090 = vst [vmem:[#allocation2 + $0x70] sm:$0xff] %v1086
        %1091 = vst [vmem:[#allocation2 + $0x78] sm:$0xff] %v1087
        %1092 = vst [vmem:[#allocation2 + $0x80] sm:$0xff] %v988
        %1093 = vst [vmem:[#allocation2 + $0x88] sm:$0xff] %v989
        %1094 = vst [vmem:[#allocation2 + $0x90] sm:$0xff] %v990
        %1095 = vst [vmem:[#allocation2 + $0x98] sm:$0xff] %v991
        %1096 = vrot.lane.b32.xlu0 %v988, 127
        %v1097 = vpop.permute.xlu0 %1096
        %1098 = vrot.lane.b32.xlu0 %v990, 127
        %v1099 = vpop.permute.xlu0 %1098
        %1100 = vrot.lane.b32.xlu0 %v989, 127
        %v1101 = vpop.permute.xlu0 %1100
        %1102 = vrot.lane.b32.xlu0 %v991, 127
        %v1103 = vpop.permute.xlu0 %1102
        %vm1104 = vcmp.lt.s32.totalorder %v312, 127
        %v1105 = vsel %vm1104, %v1097, %v1101
        %v1106 = vsel %vm1104, %v1099, %v1103
        %v1107 = vsel %vm1104, %v1101, %v1097
        %v1108 = vsel %vm1104, %v1103, %v1099
        %v1109 = vsel %vm344, 1, 0
        %v1110 = vsel %vm345, 1, 0
        %vm1111 = vcmp.eq.s32.totalorder %v1109, 1
        %vm1112 = vcmp.eq.s32.totalorder %v1110, 1
        %v1113 = vsel %vm1111, %v1105, 0.0
        %v1114 = vsel %vm1112, %v1107, 0.0
        %v1115 = vsel %vm1111, %v1106, 0.0
        %v1116 = vsel %vm1112, %v1108, 0.0
        %1117 = vst [vmem:[#allocation2 + $0xa0] sm:$0xff] %v1113
        %1118 = vst [vmem:[#allocation2 + $0xa8] sm:$0xff] %v1114
        %1119 = vst [vmem:[#allocation2 + $0xb0] sm:$0xff] %v1115
        %1120 = vst [vmem:[#allocation2 + $0xb8] sm:$0xff] %v1116
        %1121 = vrot.lane.b32.xlu0 %v988, 113
        %v1122 = vpop.permute.xlu0 %1121
        %1123 = vrot.lane.b32.xlu0 %v990, 113
        %v1124 = vpop.permute.xlu0 %1123
        %1125 = vrot.lane.b32.xlu0 %v989, 113
        %v1126 = vpop.permute.xlu0 %1125
        %1127 = vrot.lane.b32.xlu0 %v991, 113
        %v1128 = vpop.permute.xlu0 %1127
        %vm1129 = vcmp.lt.s32.totalorder %v312, 113
        %v1130 = vsel %vm1129, %v1122, %v1126
        %v1131 = vsel %vm1129, %v1124, %v1128
        %v1132 = vsel %vm1129, %v1126, %v1122
        %v1133 = vsel %vm1129, %v1128, %v1124
        %v1134 = vsel %vm350, 1, 0
        %v1135 = vsel %vm351, 1, 0
        %vm1136 = vcmp.eq.s32.totalorder %v1134, 1
        %vm1137 = vcmp.eq.s32.totalorder %v1135, 1
        %v1138 = vsel %vm1136, %v1130, 0.0
        %v1139 = vsel %vm1137, %v1132, 0.0
        %v1140 = vsel %vm1136, %v1131, 0.0
        %v1141 = vsel %vm1137, %v1133, 0.0
        %1142 = vst [vmem:[#allocation2 + $0xc0] sm:$0xff] %v1138
        %1143 = vst [vmem:[#allocation2 + $0xc8] sm:$0xff] %v1139
        %1144 = vst [vmem:[#allocation2 + $0xd0] sm:$0xff] %v1140
        %1145 = vst [vmem:[#allocation2 + $0xd8] sm:$0xff] %v1141
        %1146 = vrot.lane.b32.xlu0 %v988, 112
        %v1147 = vpop.permute.xlu0 %1146
        %1148 = vrot.lane.b32.xlu0 %v990, 112
        %v1149 = vpop.permute.xlu0 %1148
        %1150 = vrot.lane.b32.xlu0 %v989, 112
        %v1151 = vpop.permute.xlu0 %1150
        %1152 = vrot.lane.b32.xlu0 %v991, 112
        %v1153 = vpop.permute.xlu0 %1152
        %vm1154 = vcmp.lt.s32.totalorder %v312, 112
        %v1155 = vsel %vm1154, %v1147, %v1151
        %v1156 = vsel %vm1154, %v1149, %v1153
        %v1157 = vsel %vm1154, %v1151, %v1147
        %v1158 = vsel %vm1154, %v1153, %v1149
        %v1159 = vsel %vm340, 1, 0
        %v1160 = vsel %vm341, 1, 0
        %vm1161 = vcmp.eq.s32.totalorder %v1159, 1
        %vm1162 = vcmp.eq.s32.totalorder %v1160, 1
        %v1163 = vsel %vm1161, %v1155, 0.0
        %v1164 = vsel %vm1162, %v1157, 0.0
        %v1165 = vsel %vm1161, %v1156, 0.0
        %v1166 = vsel %vm1162, %v1158, 0.0
        %1167 = vst [vmem:[#allocation2 + $0xe0] sm:$0xff] %v1163
        %1168 = vst [vmem:[#allocation2 + $0xe8] sm:$0xff] %v1164
        %1169 = vst [vmem:[#allocation2 + $0xf0] sm:$0xff] %v1165
        %1170 = vst [vmem:[#allocation2 + $0xf8] sm:$0xff] %v1166
        %1171 = vrot.lane.b32.xlu0 %v988, 111
        %v1172 = vpop.permute.xlu0 %1171
        %1173 = vrot.lane.b32.xlu0 %v990, 111
        %v1174 = vpop.permute.xlu0 %1173
        %1175 = vrot.lane.b32.xlu0 %v989, 111
        %v1176 = vpop.permute.xlu0 %1175
        %1177 = vrot.lane.b32.xlu0 %v991, 111
        %v1178 = vpop.permute.xlu0 %1177
        %vm1179 = vcmp.lt.s32.totalorder %v312, 111
        %v1180 = vsel %vm1179, %v1172, %v1176
        %v1181 = vsel %vm1179, %v1174, %v1178
        %v1182 = vsel %vm1179, %v1176, %v1172
        %v1183 = vsel %vm1179, %v1178, %v1174
        %v1184 = vsel %vm352, 1, 0
        %v1185 = vsel %vm353, 1, 0
        %vm1186 = vcmp.eq.s32.totalorder %v1184, 1
        %vm1187 = vcmp.eq.s32.totalorder %v1185, 1
        %v1188 = vsel %vm1186, %v1180, 0.0
        %v1189 = vsel %vm1187, %v1182, 0.0
        %v1190 = vsel %vm1186, %v1181, 0.0
        %v1191 = vsel %vm1187, %v1183, 0.0
        %1192 = vst [vmem:[#allocation2 + $0x100] sm:$0xff] %v1188
        %1193 = vst [vmem:[#allocation2 + $0x108] sm:$0xff] %v1189
        %1194 = vst [vmem:[#allocation2 + $0x110] sm:$0xff] %v1190
        %1195 = vst [vmem:[#allocation2 + $0x118] sm:$0xff] %v1191
        %v1196 = vld [vmem:[#allocation3] sm:$0xff]
        %v1197 = vld [vmem:[#allocation3 + $0x8] sm:$0xff]
        %v1198 = vld [vmem:[#allocation3 + $0x10] sm:$0xff]
        %v1199 = vld [vmem:[#allocation3 + $0x18] sm:$0xff]
        %v1200 = vld [vmem:[#allocation2] sm:$0xff]
        %v1201 = vld [vmem:[#allocation2 + $0x8] sm:$0xff]
        %v1202 = vld [vmem:[#allocation2 + $0x10] sm:$0xff]
        %v1203 = vld [vmem:[#allocation2 + $0x18] sm:$0xff]
        %v1204 = vld [vmem:[#allocation2 + $0x20] sm:$0xff]
        %v1205 = vld [vmem:[#allocation2 + $0x28] sm:$0xff]
        %v1206 = vld [vmem:[#allocation2 + $0x30] sm:$0xff]
        %v1207 = vld [vmem:[#allocation2 + $0x38] sm:$0xff]
        %v1208 = vld [vmem:[#allocation2 + $0x40] sm:$0xff]
        %v1209 = vld [vmem:[#allocation2 + $0x48] sm:$0xff]
        %v1210 = vld [vmem:[#allocation2 + $0x50] sm:$0xff]
        %v1211 = vld [vmem:[#allocation2 + $0x58] sm:$0xff]
        %v1212 = vld [vmem:[#allocation2 + $0x60] sm:$0xff]
        %v1213 = vld [vmem:[#allocation2 + $0x68] sm:$0xff]
        %v1214 = vld [vmem:[#allocation2 + $0x70] sm:$0xff]
        %v1215 = vld [vmem:[#allocation2 + $0x78] sm:$0xff]
        %v1216 = vld [vmem:[#allocation2 + $0x80] sm:$0xff]
        %v1217 = vld [vmem:[#allocation2 + $0x88] sm:$0xff]
        %v1218 = vld [vmem:[#allocation2 + $0x90] sm:$0xff]
        %v1219 = vld [vmem:[#allocation2 + $0x98] sm:$0xff]
        %v1220 = vld [vmem:[#allocation2 + $0xa0] sm:$0xff]
        %v1221 = vld [vmem:[#allocation2 + $0xa8] sm:$0xff]
        %v1222 = vld [vmem:[#allocation2 + $0xb0] sm:$0xff]
        %v1223 = vld [vmem:[#allocation2 + $0xb8] sm:$0xff]
        %v1224 = vld [vmem:[#allocation2 + $0xc0] sm:$0xff]
        %v1225 = vld [vmem:[#allocation2 + $0xc8] sm:$0xff]
        %v1226 = vld [vmem:[#allocation2 + $0xd0] sm:$0xff]
        %v1227 = vld [vmem:[#allocation2 + $0xd8] sm:$0xff]
        %v1228 = vld [vmem:[#allocation2 + $0xe0] sm:$0xff]
        %v1229 = vld [vmem:[#allocation2 + $0xe8] sm:$0xff]
        %v1230 = vld [vmem:[#allocation2 + $0xf0] sm:$0xff]
        %v1231 = vld [vmem:[#allocation2 + $0xf8] sm:$0xff]
        %v1232 = vld [vmem:[#allocation2 + $0x100] sm:$0xff]
        %v1233 = vld [vmem:[#allocation2 + $0x108] sm:$0xff]
        %v1234 = vld [vmem:[#allocation2 + $0x110] sm:$0xff]
        %v1235 = vld [vmem:[#allocation2 + $0x118] sm:$0xff]
        %vm1236 = vcmask 130048
        %v1238 = vsel %vm1236, %v1197, 0
        %v1241 = vsel %vm1236, %v1199, 0
        %1243 = vmatprep.subr.mxu0 %v1201
        %1244 = vmatpush1.msra.mxu0 %v1200
        %1245 = vmatprep.subr.mxu0 %v1203
        %1246 = vmatpush1.msra.mxu0 %v1202
        %1247 = vmatprep.subr.mxu0 %v1205
        %1248 = vmatpush1.msra.mxu0 %v1204
        %1249 = vmatprep.subr.mxu0 %v1207
        %1250 = vmatpush1.msra.mxu0 %v1206
        %1251 = vmatprep.subr.mxu0 %v1209
        %1252 = vmatpush1.msra.mxu0 %v1208
        %1253 = vmatprep.subr.mxu0 %v1211
        %1254 = vmatpush1.msra.mxu0 %v1210
        %1255 = vmatprep.subr.mxu0 %v1213
        %1256 = vmatpush1.msra.mxu0 %v1212
        %1257 = vmatprep.subr.mxu0 %v1215
        %1258 = vmatpush1.msra.mxu0 %v1214
        %1259 = vmatprep.subr.mxu0 %v1217
        %1260 = vmatpush1.msra.mxu0 %v1216
        %1261 = vmatprep.subr.mxu0 %v1219
        %1262 = vmatpush1.msra.mxu0 %v1218
        %1263 = vmatprep.subr.mxu0 %v1221
        %1264 = vmatpush1.msra.mxu0 %v1220
        %1265 = vmatprep.subr.mxu0 %v1223
        %1266 = vmatpush1.msra.mxu0 %v1222
        %1267 = vmatprep.subr.mxu0 %v1225
        %1268 = vmatpush1.msra.mxu0 %v1224
        %1269 = vmatprep.subr.mxu0 %v1227
        %1270 = vmatpush1.msra.mxu0 %v1226
        %1271 = vmatprep.subr.mxu0 %v1229
        %1272 = vmatpush1.msra.mxu0 %v1228
        %1273 = vmatprep.subr.mxu0 %v1231
        %1274 = vmatpush1.msra.mxu0 %v1230
        %1275 = vmatprep.subr.mxu0 %v1233
        %1276 = vmatpush1.msra.mxu0 %v1232
        %1277 = vmatprep.subr.mxu0 %v1235
        %1278 = vmatpush1.msra.mxu0 %v1234
        %1279 = vmatprep.subr.mxu0 0.0
        %1280 = vmatpush1.msra.mxu0 0.0
        %1281 = vmatprep.subr.mxu0 0.0
        %1282 = vmatpush1.msra.mxu0 0.0
        %1283 = vmatprep.subr.mxu0 0.0
        %1284 = vmatpush1.msra.mxu0 0.0
        %1285 = vmatprep.subr.mxu0 0.0
        %1286 = vmatpush1.msra.mxu0 0.0
        %1287 = vmatprep.subr.mxu0 0.0
        %1288 = vmatpush1.msra.mxu0 0.0
        %1289 = vmatprep.subr.mxu0 0.0
        %1290 = vmatpush1.msra.mxu0 0.0
        %1291 = vmatprep.subr.mxu0 0.0
        %1292 = vmatpush1.msra.mxu0 0.0
        %1293 = vmatprep.subr.mxu0 0.0
        %1294 = vmatpush1.msra.mxu0 0.0
        %1295 = vmatprep.subr.mxu0 0.0
        %1296 = vmatpush1.msra.mxu0 0.0
        %1297 = vmatprep.subr.mxu0 0.0
        %1298 = vmatpush1.msra.mxu0 0.0
        %1299 = vmatprep.subr.mxu0 0.0
        %1300 = vmatpush1.msra.mxu0 0.0
        %1301 = vmatprep.subr.mxu0 0.0
        %1302 = vmatpush1.msra.mxu0 0.0
        %1303 = vmatprep.subr.mxu0 0.0
        %1304 = vmatpush1.msra.mxu0 0.0
        %1305 = vmatprep.subr.mxu0 0.0
        %1306 = vmatpush1.msra.mxu0 0.0
        %1307 = vmatprep.mubr.f32.mxu0 %v1238
        %1308 = vmatmul.mubr.f32.gmra.mrb[0].mxu0 %v1196
        %v1309 = vpop.f32.mrb[0].mxu0
        %v1310 = vadd.f32 0.0, %v1309
        %v1311 = vpop.f32.mrb[0].mxu0
        %v1312 = vadd.f32 0.0, %v1311
        %1313 = vmatprep.mubr.f32.mxu0 %v1241
        %1314 = vmatmul.mubr.f32.gmra.mrb[0].mxu0 %v1198
        %v1315 = vpop.f32.mrb[0].mxu0
        %v1316 = vadd.f32 0.0, %v1315
        %v1317 = vpop.f32.mrb[0].mxu0
        %v1318 = vadd.f32 0.0, %v1317
        %1319 = vdwg.mxu0
        %v1320 = vld [vmem:[%s3] sm:$0xff]
        %v1321 = vld [vmem:[%s3 + $0x8] sm:$0xff]
        %v1322 = vld [vmem:[%s4] sm:$0xff]
        %v1323 = vld [vmem:[%s4 + $0x8] sm:$0xff]
        %v1328 = vcombine.low %v1310, %v1312
        %v1329 = vcombine.high %v1310, %v1312
        %v1331 = vunpack.c.l.s4 1983009808
        %v1332 = vunpack.c.0.s8 %v1331
        %v1333 = vlaneseq
        %v1334 = vshrl.u32 %v1333, 7
        %v1335 = vsub.s32 %v1332, %v1334
        %v1336 = vrot.slane %v1328, %v1335
        %v1338 = vunpack.c.l.s4 1983009808
        %v1339 = vunpack.c.0.s8 %v1338
        %v1340 = vlaneseq
        %v1341 = vshrl.u32 %v1340, 7
        %v1342 = vsub.s32 %v1339, %v1341
        %v1343 = vrot.slane %v1329, %v1342
        %v1344 = vcombine.high %v1336, %v1336
        %v1345 = vcombine.high %v1343, %v1343
        %v1346 = vcombine.low %v1316, %v1318
        %v1347 = vcombine.high %v1316, %v1318
        %v1349 = vunpack.c.l.s4 1983009808
        %v1350 = vunpack.c.0.s8 %v1349
        %v1351 = vlaneseq
        %v1352 = vshrl.u32 %v1351, 7
        %v1353 = vsub.s32 %v1350, %v1352
        %v1354 = vrot.slane %v1346, %v1353
        %v1356 = vunpack.c.l.s4 1983009808
        %v1357 = vunpack.c.0.s8 %v1356
        %v1358 = vlaneseq
        %v1359 = vshrl.u32 %v1358, 7
        %v1360 = vsub.s32 %v1357, %v1359
        %v1361 = vrot.slane %v1347, %v1360
        %v1362 = vcombine.high %v1354, %v1354
        %v1363 = vcombine.high %v1361, %v1361
        %v1365 = vunpack.c.l.s4 1983009808
        %v1366 = vunpack.c.0.s8 %v1365
        %v1367 = vlaneseq
        %v1368 = vshrl.u32 %v1367, 7
        %v1369 = vsub.s32 %v1366, %v1368
        %v1370 = vrot.slane %v1336, %v1369
        %v1371 = vcombine.high %v1370, %v1370
        %v1373 = vunpack.c.l.s4 1983009808
        %v1374 = vunpack.c.0.s8 %v1373
        %v1375 = vlaneseq
        %v1376 = vshrl.u32 %v1375, 7
        %v1377 = vsub.s32 %v1374, %v1376
        %v1378 = vrot.slane %v1344, %v1377
        %v1379 = vcombine.high %v1378, %v1378
        %v1381 = vunpack.c.l.s4 1983009808
        %v1382 = vunpack.c.0.s8 %v1381
        %v1383 = vlaneseq
        %v1384 = vshrl.u32 %v1383, 7
        %v1385 = vsub.s32 %v1382, %v1384
        %v1386 = vrot.slane %v1343, %v1385
        %v1387 = vcombine.high %v1386, %v1386
        %v1389 = vunpack.c.l.s4 1983009808
        %v1390 = vunpack.c.0.s8 %v1389
        %v1391 = vlaneseq
        %v1392 = vshrl.u32 %v1391, 7
        %v1393 = vsub.s32 %v1390, %v1392
        %v1394 = vrot.slane %v1345, %v1393
        %v1395 = vcombine.high %v1394, %v1394
        %v1397 = vunpack.c.l.s4 1983009808
        %v1398 = vunpack.c.0.s8 %v1397
        %v1399 = vlaneseq
        %v1400 = vshrl.u32 %v1399, 7
        %v1401 = vsub.s32 %v1398, %v1400
        %v1402 = vrot.slane %v1354, %v1401
        %v1403 = vcombine.high %v1402, %v1402
        %v1405 = vunpack.c.l.s4 1983009808
        %v1406 = vunpack.c.0.s8 %v1405
        %v1407 = vlaneseq
        %v1408 = vshrl.u32 %v1407, 7
        %v1409 = vsub.s32 %v1406, %v1408
        %v1410 = vrot.slane %v1362, %v1409
        %v1411 = vcombine.high %v1410, %v1410
        %v1413 = vunpack.c.l.s4 1983009808
        %v1414 = vunpack.c.0.s8 %v1413
        %v1415 = vlaneseq
        %v1416 = vshrl.u32 %v1415, 7
        %v1417 = vsub.s32 %v1414, %v1416
        %v1418 = vrot.slane %v1361, %v1417
        %v1419 = vcombine.high %v1418, %v1418
        %v1421 = vunpack.c.l.s4 1983009808
        %v1422 = vunpack.c.0.s8 %v1421
        %v1423 = vlaneseq
        %v1424 = vshrl.u32 %v1423, 7
        %v1425 = vsub.s32 %v1422, %v1424
        %v1426 = vrot.slane %v1363, %v1425
        %v1427 = vcombine.high %v1426, %v1426
        %v1444 = vsel %vm482, %v1370, 0.0
        %v1445 = vsel %vm482, %v1371, 0.0
        %v1446 = vadd.f32 %v1444, %v1445
        %1447 = vadd.xlane.f32.xlu0 %v1446
        %v1448 = vpop.xlane.xlu0 %1447
        %v1449 = vsel %vm482, %v1378, 0.0
        %v1450 = vsel %vm482, %v1379, 0.0
        %v1451 = vadd.f32 %v1449, %v1450
        %1452 = vadd.xlane.f32.xlu0 %v1451
        %v1453 = vpop.xlane.xlu0 %1452
        %v1454 = vsel %vm482, %v1386, 0.0
        %v1455 = vsel %vm482, %v1387, 0.0
        %v1456 = vadd.f32 %v1454, %v1455
        %1457 = vadd.xlane.f32.xlu0 %v1456
        %v1458 = vpop.xlane.xlu0 %1457
        %v1459 = vsel %vm482, %v1394, 0.0
        %v1460 = vsel %vm482, %v1395, 0.0
        %v1461 = vadd.f32 %v1459, %v1460
        %1462 = vadd.xlane.f32.xlu0 %v1461
        %v1463 = vpop.xlane.xlu0 %1462
        %v1464 = vsel %vm482, %v1402, 0.0
        %v1465 = vsel %vm482, %v1403, 0.0
        %v1466 = vadd.f32 %v1464, %v1465
        %1467 = vadd.xlane.f32.xlu0 %v1466
        %v1468 = vpop.xlane.xlu0 %1467
        %v1469 = vsel %vm482, %v1410, 0.0
        %v1470 = vsel %vm482, %v1411, 0.0
        %v1471 = vadd.f32 %v1469, %v1470
        %1472 = vadd.xlane.f32.xlu0 %v1471
        %v1473 = vpop.xlane.xlu0 %1472
        %v1474 = vsel %vm482, %v1418, 0.0
        %v1475 = vsel %vm482, %v1419, 0.0
        %v1476 = vadd.f32 %v1474, %v1475
        %1477 = vadd.xlane.f32.xlu0 %v1476
        %v1478 = vpop.xlane.xlu0 %1477
        %v1479 = vsel %vm482, %v1426, 0.0
        %v1480 = vsel %vm482, %v1427, 0.0
        %v1481 = vadd.f32 %v1479, %v1480
        %1482 = vadd.xlane.f32.xlu0 %v1481
        %v1483 = vpop.xlane.xlu0 %1482
        %v1484 = vsel %vm482, %v1448, 0.0
        %v1485 = vrot.slane %v1484, 4
        %v1486 = vadd.f32 %v1484, %v1485
        %v1487 = vrot.slane %v1486, 2
        %v1488 = vadd.f32 %v1486, %v1487
        %v1489 = vrot.slane %v1488, 1
        %v1490 = vadd.f32 %v1488, %v1489
        %v1491 = vsel %vm482, %v1453, 0.0
        %v1492 = vrot.slane %v1491, 4
        %v1493 = vadd.f32 %v1491, %v1492
        %v1494 = vrot.slane %v1493, 2
        %v1495 = vadd.f32 %v1493, %v1494
        %v1496 = vrot.slane %v1495, 1
        %v1497 = vadd.f32 %v1495, %v1496
        %v1498 = vsel %vm482, %v1458, 0.0
        %v1499 = vrot.slane %v1498, 4
        %v1500 = vadd.f32 %v1498, %v1499
        %v1501 = vrot.slane %v1500, 2
        %v1502 = vadd.f32 %v1500, %v1501
        %v1503 = vrot.slane %v1502, 1
        %v1504 = vadd.f32 %v1502, %v1503
        %v1505 = vsel %vm482, %v1463, 0.0
        %v1506 = vrot.slane %v1505, 4
        %v1507 = vadd.f32 %v1505, %v1506
        %v1508 = vrot.slane %v1507, 2
        %v1509 = vadd.f32 %v1507, %v1508
        %v1510 = vrot.slane %v1509, 1
        %v1511 = vadd.f32 %v1509, %v1510
        %v1512 = vsel %vm482, %v1468, 0.0
        %v1513 = vrot.slane %v1512, 4
        %v1514 = vadd.f32 %v1512, %v1513
        %v1515 = vrot.slane %v1514, 2
        %v1516 = vadd.f32 %v1514, %v1515
        %v1517 = vrot.slane %v1516, 1
        %v1518 = vadd.f32 %v1516, %v1517
        %v1519 = vsel %vm482, %v1473, 0.0
        %v1520 = vrot.slane %v1519, 4
        %v1521 = vadd.f32 %v1519, %v1520
        %v1522 = vrot.slane %v1521, 2
        %v1523 = vadd.f32 %v1521, %v1522
        %v1524 = vrot.slane %v1523, 1
        %v1525 = vadd.f32 %v1523, %v1524
        %v1526 = vsel %vm482, %v1478, 0.0
        %v1527 = vrot.slane %v1526, 4
        %v1528 = vadd.f32 %v1526, %v1527
        %v1529 = vrot.slane %v1528, 2
        %v1530 = vadd.f32 %v1528, %v1529
        %v1531 = vrot.slane %v1530, 1
        %v1532 = vadd.f32 %v1530, %v1531
        %v1533 = vsel %vm482, %v1483, 0.0
        %v1534 = vrot.slane %v1533, 4
        %v1535 = vadd.f32 %v1533, %v1534
        %v1536 = vrot.slane %v1535, 2
        %v1537 = vadd.f32 %v1535, %v1536
        %v1538 = vrot.slane %v1537, 1
        %v1539 = vadd.f32 %v1537, %v1538
        %v1540 = vmul.f32 %v1490, %v579
        %v1541 = vmul.f32 %v1497, %v579
        %v1542 = vmul.f32 %v1504, %v579
        %v1543 = vmul.f32 %v1511, %v579
        %v1544 = vmul.f32 %v1518, %v579
        %v1545 = vmul.f32 %v1525, %v579
        %v1546 = vmul.f32 %v1532, %v579
        %v1547 = vmul.f32 %v1539, %v579
        %v1556 = vcombine.low %v1540, %v1541
        %v1557 = vcombine.low %v1542, %v1543
        %v1559 = vunpack.c.l.s4 1983009808
        %v1560 = vunpack.c.0.s8 %v1559
        %v1561 = vlaneseq
        %v1562 = vshrl.u32 %v1561, 7
        %v1563 = vsub.s32 %v1560, %v1562
        %v1564 = vrot.slane %v1556, %v1563
        %v1566 = vunpack.c.l.s4 1983009808
        %v1567 = vunpack.c.0.s8 %v1566
        %v1568 = vlaneseq
        %v1569 = vshrl.u32 %v1568, 7
        %v1570 = vsub.s32 %v1567, %v1569
        %v1571 = vrot.slane %v1557, %v1570
        %v1572 = vcombine.low %v1564, %v1571
        %v1573 = vcombine.high %v1564, %v1571
        %v1574 = vcombine.low %v1544, %v1545
        %v1575 = vcombine.low %v1546, %v1547
        %v1577 = vunpack.c.l.s4 1983009808
        %v1578 = vunpack.c.0.s8 %v1577
        %v1579 = vlaneseq
        %v1580 = vshrl.u32 %v1579, 7
        %v1581 = vsub.s32 %v1578, %v1580
        %v1582 = vrot.slane %v1574, %v1581
        %v1584 = vunpack.c.l.s4 1983009808
        %v1585 = vunpack.c.0.s8 %v1584
        %v1586 = vlaneseq
        %v1587 = vshrl.u32 %v1586, 7
        %v1588 = vsub.s32 %v1585, %v1587
        %v1589 = vrot.slane %v1575, %v1588
        %v1590 = vcombine.low %v1582, %v1589
        %v1591 = vcombine.high %v1582, %v1589
        %v1596 = vsub.f32 %v1310, %v1572
        %v1597 = vsub.f32 %v1312, %v1573
        %v1598 = vsub.f32 %v1316, %v1590
        %v1599 = vsub.f32 %v1318, %v1591
        %v1600 = vmul.f32 %v1596, %v1596
        %v1601 = vmul.f32 %v1597, %v1597
        %v1602 = vmul.f32 %v1598, %v1598
        %v1603 = vmul.f32 %v1599, %v1599
        %v1608 = vcombine.low %v1600, %v1601
        %v1609 = vcombine.high %v1600, %v1601
        %v1611 = vunpack.c.l.s4 1983009808
        %v1612 = vunpack.c.0.s8 %v1611
        %v1613 = vlaneseq
        %v1614 = vshrl.u32 %v1613, 7
        %v1615 = vsub.s32 %v1612, %v1614
        %v1616 = vrot.slane %v1608, %v1615
        %v1618 = vunpack.c.l.s4 1983009808
        %v1619 = vunpack.c.0.s8 %v1618
        %v1620 = vlaneseq
        %v1621 = vshrl.u32 %v1620, 7
        %v1622 = vsub.s32 %v1619, %v1621
        %v1623 = vrot.slane %v1609, %v1622
        %v1624 = vcombine.high %v1616, %v1616
        %v1625 = vcombine.high %v1623, %v1623
        %v1626 = vcombine.low %v1602, %v1603
        %v1627 = vcombine.high %v1602, %v1603
        %v1629 = vunpack.c.l.s4 1983009808
        %v1630 = vunpack.c.0.s8 %v1629
        %v1631 = vlaneseq
        %v1632 = vshrl.u32 %v1631, 7
        %v1633 = vsub.s32 %v1630, %v1632
        %v1634 = vrot.slane %v1626, %v1633
        %v1636 = vunpack.c.l.s4 1983009808
        %v1637 = vunpack.c.0.s8 %v1636
        %v1638 = vlaneseq
        %v1639 = vshrl.u32 %v1638, 7
        %v1640 = vsub.s32 %v1637, %v1639
        %v1641 = vrot.slane %v1627, %v1640
        %v1642 = vcombine.high %v1634, %v1634
        %v1643 = vcombine.high %v1641, %v1641
        %v1645 = vunpack.c.l.s4 1983009808
        %v1646 = vunpack.c.0.s8 %v1645
        %v1647 = vlaneseq
        %v1648 = vshrl.u32 %v1647, 7
        %v1649 = vsub.s32 %v1646, %v1648
        %v1650 = vrot.slane %v1616, %v1649
        %v1651 = vcombine.high %v1650, %v1650
        %v1653 = vunpack.c.l.s4 1983009808
        %v1654 = vunpack.c.0.s8 %v1653
        %v1655 = vlaneseq
        %v1656 = vshrl.u32 %v1655, 7
        %v1657 = vsub.s32 %v1654, %v1656
        %v1658 = vrot.slane %v1624, %v1657
        %v1659 = vcombine.high %v1658, %v1658
        %v1661 = vunpack.c.l.s4 1983009808
        %v1662 = vunpack.c.0.s8 %v1661
        %v1663 = vlaneseq
        %v1664 = vshrl.u32 %v1663, 7
        %v1665 = vsub.s32 %v1662, %v1664
        %v1666 = vrot.slane %v1623, %v1665
        %v1667 = vcombine.high %v1666, %v1666
        %v1669 = vunpack.c.l.s4 1983009808
        %v1670 = vunpack.c.0.s8 %v1669
        %v1671 = vlaneseq
        %v1672 = vshrl.u32 %v1671, 7
        %v1673 = vsub.s32 %v1670, %v1672
        %v1674 = vrot.slane %v1625, %v1673
        %v1675 = vcombine.high %v1674, %v1674
        %v1677 = vunpack.c.l.s4 1983009808
        %v1678 = vunpack.c.0.s8 %v1677
        %v1679 = vlaneseq
        %v1680 = vshrl.u32 %v1679, 7
        %v1681 = vsub.s32 %v1678, %v1680
        %v1682 = vrot.slane %v1634, %v1681
        %v1683 = vcombine.high %v1682, %v1682
        %v1685 = vunpack.c.l.s4 1983009808
        %v1686 = vunpack.c.0.s8 %v1685
        %v1687 = vlaneseq
        %v1688 = vshrl.u32 %v1687, 7
        %v1689 = vsub.s32 %v1686, %v1688
        %v1690 = vrot.slane %v1642, %v1689
        %v1691 = vcombine.high %v1690, %v1690
        %v1693 = vunpack.c.l.s4 1983009808
        %v1694 = vunpack.c.0.s8 %v1693
        %v1695 = vlaneseq
        %v1696 = vshrl.u32 %v1695, 7
        %v1697 = vsub.s32 %v1694, %v1696
        %v1698 = vrot.slane %v1641, %v1697
        %v1699 = vcombine.high %v1698, %v1698
        %v1701 = vunpack.c.l.s4 1983009808
        %v1702 = vunpack.c.0.s8 %v1701
        %v1703 = vlaneseq
        %v1704 = vshrl.u32 %v1703, 7
        %v1705 = vsub.s32 %v1702, %v1704
        %v1706 = vrot.slane %v1643, %v1705
        %v1707 = vcombine.high %v1706, %v1706
        %v1724 = vsel %vm482, %v1650, 0.0
        %v1725 = vsel %vm482, %v1651, 0.0
        %v1726 = vadd.f32 %v1724, %v1725
        %1727 = vadd.xlane.f32.xlu0 %v1726
        %v1728 = vpop.xlane.xlu0 %1727
        %v1729 = vsel %vm482, %v1658, 0.0
        %v1730 = vsel %vm482, %v1659, 0.0
        %v1731 = vadd.f32 %v1729, %v1730
        %1732 = vadd.xlane.f32.xlu0 %v1731
        %v1733 = vpop.xlane.xlu0 %1732
        %v1734 = vsel %vm482, %v1666, 0.0
        %v1735 = vsel %vm482, %v1667, 0.0
        %v1736 = vadd.f32 %v1734, %v1735
        %1737 = vadd.xlane.f32.xlu0 %v1736
        %v1738 = vpop.xlane.xlu0 %1737
        %v1739 = vsel %vm482, %v1674, 0.0
        %v1740 = vsel %vm482, %v1675, 0.0
        %v1741 = vadd.f32 %v1739, %v1740
        %1742 = vadd.xlane.f32.xlu0 %v1741
        %v1743 = vpop.xlane.xlu0 %1742
        %v1744 = vsel %vm482, %v1682, 0.0
        %v1745 = vsel %vm482, %v1683, 0.0
        %v1746 = vadd.f32 %v1744, %v1745
        %1747 = vadd.xlane.f32.xlu0 %v1746
        %v1748 = vpop.xlane.xlu0 %1747
        %v1749 = vsel %vm482, %v1690, 0.0
        %v1750 = vsel %vm482, %v1691, 0.0
        %v1751 = vadd.f32 %v1749, %v1750
        %1752 = vadd.xlane.f32.xlu0 %v1751
        %v1753 = vpop.xlane.xlu0 %1752
        %v1754 = vsel %vm482, %v1698, 0.0
        %v1755 = vsel %vm482, %v1699, 0.0
        %v1756 = vadd.f32 %v1754, %v1755
        %1757 = vadd.xlane.f32.xlu0 %v1756
        %v1758 = vpop.xlane.xlu0 %1757
        %v1759 = vsel %vm482, %v1706, 0.0
        %v1760 = vsel %vm482, %v1707, 0.0
        %v1761 = vadd.f32 %v1759, %v1760
        %1762 = vadd.xlane.f32.xlu0 %v1761
        %v1763 = vpop.xlane.xlu0 %1762
        %v1764 = vsel %vm482, %v1728, 0.0
        %v1765 = vrot.slane %v1764, 4
        %v1766 = vadd.f32 %v1764, %v1765
        %v1767 = vrot.slane %v1766, 2
        %v1768 = vadd.f32 %v1766, %v1767
        %v1769 = vrot.slane %v1768, 1
        %v1770 = vadd.f32 %v1768, %v1769
        %v1771 = vsel %vm482, %v1733, 0.0
        %v1772 = vrot.slane %v1771, 4
        %v1773 = vadd.f32 %v1771, %v1772
        %v1774 = vrot.slane %v1773, 2
        %v1775 = vadd.f32 %v1773, %v1774
        %v1776 = vrot.slane %v1775, 1
        %v1777 = vadd.f32 %v1775, %v1776
        %v1778 = vsel %vm482, %v1738, 0.0
        %v1779 = vrot.slane %v1778, 4
        %v1780 = vadd.f32 %v1778, %v1779
        %v1781 = vrot.slane %v1780, 2
        %v1782 = vadd.f32 %v1780, %v1781
        %v1783 = vrot.slane %v1782, 1
        %v1784 = vadd.f32 %v1782, %v1783
        %v1785 = vsel %vm482, %v1743, 0.0
        %v1786 = vrot.slane %v1785, 4
        %v1787 = vadd.f32 %v1785, %v1786
        %v1788 = vrot.slane %v1787, 2
        %v1789 = vadd.f32 %v1787, %v1788
        %v1790 = vrot.slane %v1789, 1
        %v1791 = vadd.f32 %v1789, %v1790
        %v1792 = vsel %vm482, %v1748, 0.0
        %v1793 = vrot.slane %v1792, 4
        %v1794 = vadd.f32 %v1792, %v1793
        %v1795 = vrot.slane %v1794, 2
        %v1796 = vadd.f32 %v1794, %v1795
        %v1797 = vrot.slane %v1796, 1
        %v1798 = vadd.f32 %v1796, %v1797
        %v1799 = vsel %vm482, %v1753, 0.0
        %v1800 = vrot.slane %v1799, 4
        %v1801 = vadd.f32 %v1799, %v1800
        %v1802 = vrot.slane %v1801, 2
        %v1803 = vadd.f32 %v1801, %v1802
        %v1804 = vrot.slane %v1803, 1
        %v1805 = vadd.f32 %v1803, %v1804
        %v1806 = vsel %vm482, %v1758, 0.0
        %v1807 = vrot.slane %v1806, 4
        %v1808 = vadd.f32 %v1806, %v1807
        %v1809 = vrot.slane %v1808, 2
        %v1810 = vadd.f32 %v1808, %v1809
        %v1811 = vrot.slane %v1810, 1
        %v1812 = vadd.f32 %v1810, %v1811
        %v1813 = vsel %vm482, %v1763, 0.0
        %v1814 = vrot.slane %v1813, 4
        %v1815 = vadd.f32 %v1813, %v1814
        %v1816 = vrot.slane %v1815, 2
        %v1817 = vadd.f32 %v1815, %v1816
        %v1818 = vrot.slane %v1817, 1
        %v1819 = vadd.f32 %v1817, %v1818
        %v1820 = vmul.f32 %v1770, %v579
        %v1821 = vmul.f32 %v1777, %v579
        %v1822 = vmul.f32 %v1784, %v579
        %v1823 = vmul.f32 %v1791, %v579
        %v1824 = vmul.f32 %v1798, %v579
        %v1825 = vmul.f32 %v1805, %v579
        %v1826 = vmul.f32 %v1812, %v579
        %v1827 = vmul.f32 %v1819, %v579
        %v1828 = vadd.f32 %v1820, 1e-05
        %v1829 = vadd.f32 %v1821, 1e-05
        %v1830 = vadd.f32 %v1822, 1e-05
        %v1831 = vadd.f32 %v1823, 1e-05
        %v1832 = vadd.f32 %v1824, 1e-05
        %v1833 = vadd.f32 %v1825, 1e-05
        %v1834 = vadd.f32 %v1826, 1e-05
        %v1835 = vadd.f32 %v1827, 1e-05
        %v1836 = vrsqrt.pop %v1828
        %v1837 = vrsqrt.pop %v1829
        %v1838 = vrsqrt.pop %v1830
        %v1839 = vrsqrt.pop %v1831
        %v1840 = vrsqrt.pop %v1832
        %v1841 = vrsqrt.pop %v1833
        %v1842 = vrsqrt.pop %v1834
        %v1843 = vrsqrt.pop %v1835
        %v1852 = vcombine.low %v1836, %v1837
        %v1853 = vcombine.low %v1838, %v1839
        %v1855 = vunpack.c.l.s4 1983009808
        %v1856 = vunpack.c.0.s8 %v1855
        %v1857 = vlaneseq
        %v1858 = vshrl.u32 %v1857, 7
        %v1859 = vsub.s32 %v1856, %v1858
        %v1860 = vrot.slane %v1852, %v1859
        %v1862 = vunpack.c.l.s4 1983009808
        %v1863 = vunpack.c.0.s8 %v1862
        %v1864 = vlaneseq
        %v1865 = vshrl.u32 %v1864, 7
        %v1866 = vsub.s32 %v1863, %v1865
        %v1867 = vrot.slane %v1853, %v1866
        %v1868 = vcombine.low %v1860, %v1867
        %v1869 = vcombine.high %v1860, %v1867
        %v1870 = vcombine.low %v1840, %v1841
        %v1871 = vcombine.low %v1842, %v1843
        %v1873 = vunpack.c.l.s4 1983009808
        %v1874 = vunpack.c.0.s8 %v1873
        %v1875 = vlaneseq
        %v1876 = vshrl.u32 %v1875, 7
        %v1877 = vsub.s32 %v1874, %v1876
        %v1878 = vrot.slane %v1870, %v1877
        %v1880 = vunpack.c.l.s4 1983009808
        %v1881 = vunpack.c.0.s8 %v1880
        %v1882 = vlaneseq
        %v1883 = vshrl.u32 %v1882, 7
        %v1884 = vsub.s32 %v1881, %v1883
        %v1885 = vrot.slane %v1871, %v1884
        %v1886 = vcombine.low %v1878, %v1885
        %v1887 = vcombine.high %v1878, %v1885
        %v1892 = vmul.f32 %v1596, %v1868
        %v1893 = vmul.f32 %v1597, %v1869
        %v1894 = vmul.f32 %v1598, %v1886
        %v1895 = vmul.f32 %v1599, %v1887
        %1897 = vset.pattern.permute.xlu0 0
        %1898 = vperm.xlu0 %1897, %v1320
        %v1899 = vpop.permute.xlu0 %1898
        %1902 = vset.pattern.permute.xlu0 0
        %1903 = vperm.xlu0 %1902, %v1321
        %v1904 = vpop.permute.xlu0 %1903
        %v1906 = vmul.f32 %v1892, %v1899
        %v1907 = vmul.f32 %v1893, %v1899
        %v1908 = vmul.f32 %v1894, %v1904
        %v1909 = vmul.f32 %v1895, %v1904
        %1911 = vset.pattern.permute.xlu0 0
        %1912 = vperm.xlu0 %1911, %v1322
        %v1913 = vpop.permute.xlu0 %1912
        %1916 = vset.pattern.permute.xlu0 0
        %1917 = vperm.xlu0 %1916, %v1323
        %v1918 = vpop.permute.xlu0 %1917
        %v1920 = vadd.f32 %v1906, %v1913
        %v1921 = vadd.f32 %v1907, %v1913
        %v1922 = vadd.f32 %v1908, %v1918
        %v1923 = vadd.f32 %v1909, %v1918
        %v1924 = vxor.u32 %v1920, 2147483648
        %v1925 = vxor.u32 %v1921, 2147483648
        %v1926 = vxor.u32 %v1922, 2147483648
        %v1927 = vxor.u32 %v1923, 2147483648
        %v1928 = vmul.f32 %v1924, 1.442695
        %v1929 = vpow.pop %v1928
        %v1930 = vmul.f32 %v1925, 1.442695
        %v1931 = vpow.pop %v1930
        %v1932 = vmul.f32 %v1926, 1.442695
        %v1933 = vpow.pop %v1932
        %v1934 = vmul.f32 %v1927, 1.442695
        %v1935 = vpow.pop %v1934
        %v1936 = vadd.f32 %v1929, 1.0
        %v1937 = vadd.f32 %v1931, 1.0
        %v1938 = vadd.f32 %v1933, 1.0
        %v1939 = vadd.f32 %v1935, 1.0
        %v1940 = vrcp.pop %v1936
        %v1941 = vmul.f32 1.0, %v1940
        %v1942 = vrcp.pop %v1937
        %v1943 = vmul.f32 1.0, %v1942
        %v1944 = vrcp.pop %v1938
        %v1945 = vmul.f32 1.0, %v1944
        %v1946 = vrcp.pop %v1939
        %v1947 = vmul.f32 1.0, %v1946
        %v1948 = vmul.f32 %v1920, %v1941
        %v1949 = vmul.f32 %v1921, %v1943
        %v1950 = vmul.f32 %v1922, %v1945
        %v1951 = vmul.f32 %v1923, %v1947
        %1952 = vrot.lane.b32.xlu0 %v1948, 17
        %v1953 = vpop.permute.xlu0 %1952
        %1954 = vrot.lane.b32.xlu0 %v1950, 17
        %v1955 = vpop.permute.xlu0 %1954
        %1956 = vrot.lane.b32.xlu0 %v1949, 17
        %v1957 = vpop.permute.xlu0 %1956
        %1958 = vrot.lane.b32.xlu0 %v1951, 17
        %v1959 = vpop.permute.xlu0 %1958
        %v1960 = vsel %vm1000, %v1953, %v1957
        %v1961 = vsel %vm1000, %v1955, %v1959
        %v1962 = vsel %vm1000, %v1957, %v1953
        %v1963 = vsel %vm1000, %v1959, %v1955
        %v1964 = vsel %vm1007, %v1962, 0.0
        %v1965 = vsel %vm1008, %v1960, 0.0
        %v1966 = vsel %vm1007, %v1963, 0.0
        %v1967 = vsel %vm1008, %v1961, 0.0
        %1968 = vst [vmem:[#allocation2] sm:$0xff] %v1964
        %1969 = vst [vmem:[#allocation2 + $0x8] sm:$0xff] %v1965
        %1970 = vst [vmem:[#allocation2 + $0x10] sm:$0xff] %v1966
        %1971 = vst [vmem:[#allocation2 + $0x18] sm:$0xff] %v1967
        %1972 = vrot.lane.b32.xlu0 %v1948, 16
        %v1973 = vpop.permute.xlu0 %1972
        %1974 = vrot.lane.b32.xlu0 %v1950, 16
        %v1975 = vpop.permute.xlu0 %1974
        %1976 = vrot.lane.b32.xlu0 %v1949, 16
        %v1977 = vpop.permute.xlu0 %1976
        %1978 = vrot.lane.b32.xlu0 %v1951, 16
        %v1979 = vpop.permute.xlu0 %1978
        %v1980 = vsel %vm1025, %v1973, %v1977
        %v1981 = vsel %vm1025, %v1975, %v1979
        %v1982 = vsel %vm1025, %v1977, %v1973
        %v1983 = vsel %vm1025, %v1979, %v1975
        %v1984 = vsel %vm1032, %v1982, 0.0
        %v1985 = vsel %vm1033, %v1980, 0.0
        %v1986 = vsel %vm1032, %v1983, 0.0
        %v1987 = vsel %vm1033, %v1981, 0.0
        %1988 = vst [vmem:[#allocation2 + $0x20] sm:$0xff] %v1984
        %1989 = vst [vmem:[#allocation2 + $0x28] sm:$0xff] %v1985
        %1990 = vst [vmem:[#allocation2 + $0x30] sm:$0xff] %v1986
        %1991 = vst [vmem:[#allocation2 + $0x38] sm:$0xff] %v1987
        %1992 = vrot.lane.b32.xlu0 %v1948, 15
        %v1993 = vpop.permute.xlu0 %1992
        %1994 = vrot.lane.b32.xlu0 %v1950, 15
        %v1995 = vpop.permute.xlu0 %1994
        %1996 = vrot.lane.b32.xlu0 %v1949, 15
        %v1997 = vpop.permute.xlu0 %1996
        %1998 = vrot.lane.b32.xlu0 %v1951, 15
        %v1999 = vpop.permute.xlu0 %1998
        %v2000 = vsel %vm1050, %v1993, %v1997
        %v2001 = vsel %vm1050, %v1995, %v1999
        %v2002 = vsel %vm1050, %v1997, %v1993
        %v2003 = vsel %vm1050, %v1999, %v1995
        %v2004 = vsel %vm1057, %v2002, 0.0
        %v2005 = vsel %vm1058, %v2000, 0.0
        %v2006 = vsel %vm1057, %v2003, 0.0
        %v2007 = vsel %vm1058, %v2001, 0.0
        %2008 = vst [vmem:[#allocation2 + $0x40] sm:$0xff] %v2004
        %2009 = vst [vmem:[#allocation2 + $0x48] sm:$0xff] %v2005
        %2010 = vst [vmem:[#allocation2 + $0x50] sm:$0xff] %v2006
        %2011 = vst [vmem:[#allocation2 + $0x58] sm:$0xff] %v2007
        %2012 = vrot.lane.b32.xlu0 %v1948, 1
        %v2013 = vpop.permute.xlu0 %2012
        %2014 = vrot.lane.b32.xlu0 %v1950, 1
        %v2015 = vpop.permute.xlu0 %2014
        %2016 = vrot.lane.b32.xlu0 %v1949, 1
        %v2017 = vpop.permute.xlu0 %2016
        %2018 = vrot.lane.b32.xlu0 %v1951, 1
        %v2019 = vpop.permute.xlu0 %2018
        %v2020 = vsel %vm1075, %v2013, %v2017
        %v2021 = vsel %vm1075, %v2015, %v2019
        %v2022 = vsel %vm1075, %v2017, %v2013
        %v2023 = vsel %vm1075, %v2019, %v2015
        %v2024 = vsel %vm1082, %v2022, 0.0
        %v2025 = vsel %vm1083, %v2020, 0.0
        %v2026 = vsel %vm1082, %v2023, 0.0
        %v2027 = vsel %vm1083, %v2021, 0.0
        %2028 = vst [vmem:[#allocation2 + $0x60] sm:$0xff] %v2024
        %2029 = vst [vmem:[#allocation2 + $0x68] sm:$0xff] %v2025
        %2030 = vst [vmem:[#allocation2 + $0x70] sm:$0xff] %v2026
        %2031 = vst [vmem:[#allocation2 + $0x78] sm:$0xff] %v2027
        %2032 = vst [vmem:[#allocation2 + $0x80] sm:$0xff] %v1948
        %2033 = vst [vmem:[#allocation2 + $0x88] sm:$0xff] %v1949
        %2034 = vst [vmem:[#allocation2 + $0x90] sm:$0xff] %v1950
        %2035 = vst [vmem:[#allocation2 + $0x98] sm:$0xff] %v1951
        %2036 = vrot.lane.b32.xlu0 %v1948, 127
        %v2037 = vpop.permute.xlu0 %2036
        %2038 = vrot.lane.b32.xlu0 %v1950, 127
        %v2039 = vpop.permute.xlu0 %2038
        %2040 = vrot.lane.b32.xlu0 %v1949, 127
        %v2041 = vpop.permute.xlu0 %2040
        %2042 = vrot.lane.b32.xlu0 %v1951, 127
        %v2043 = vpop.permute.xlu0 %2042
        %v2044 = vsel %vm1104, %v2037, %v2041
        %v2045 = vsel %vm1104, %v2039, %v2043
        %v2046 = vsel %vm1104, %v2041, %v2037
        %v2047 = vsel %vm1104, %v2043, %v2039
        %v2048 = vsel %vm1111, %v2044, 0.0
        %v2049 = vsel %vm1112, %v2046, 0.0
        %v2050 = vsel %vm1111, %v2045, 0.0
        %v2051 = vsel %vm1112, %v2047, 0.0
        %2052 = vst [vmem:[#allocation2 + $0xa0] sm:$0xff] %v2048
        %2053 = vst [vmem:[#allocation2 + $0xa8] sm:$0xff] %v2049
        %2054 = vst [vmem:[#allocation2 + $0xb0] sm:$0xff] %v2050
        %2055 = vst [vmem:[#allocation2 + $0xb8] sm:$0xff] %v2051
        %2056 = vrot.lane.b32.xlu0 %v1948, 113
        %v2057 = vpop.permute.xlu0 %2056
        %2058 = vrot.lane.b32.xlu0 %v1950, 113
        %v2059 = vpop.permute.xlu0 %2058
        %2060 = vrot.lane.b32.xlu0 %v1949, 113
        %v2061 = vpop.permute.xlu0 %2060
        %2062 = vrot.lane.b32.xlu0 %v1951, 113
        %v2063 = vpop.permute.xlu0 %2062
        %v2064 = vsel %vm1129, %v2057, %v2061
        %v2065 = vsel %vm1129, %v2059, %v2063
        %v2066 = vsel %vm1129, %v2061, %v2057
        %v2067 = vsel %vm1129, %v2063, %v2059
        %v2068 = vsel %vm1136, %v2064, 0.0
        %v2069 = vsel %vm1137, %v2066, 0.0
        %v2070 = vsel %vm1136, %v2065, 0.0
        %v2071 = vsel %vm1137, %v2067, 0.0
        %2072 = vst [vmem:[#allocation2 + $0xc0] sm:$0xff] %v2068
        %2073 = vst [vmem:[#allocation2 + $0xc8] sm:$0xff] %v2069
        %2074 = vst [vmem:[#allocation2 + $0xd0] sm:$0xff] %v2070
        %2075 = vst [vmem:[#allocation2 + $0xd8] sm:$0xff] %v2071
        %2076 = vrot.lane.b32.xlu0 %v1948, 112
        %v2077 = vpop.permute.xlu0 %2076
        %2078 = vrot.lane.b32.xlu0 %v1950, 112
        %v2079 = vpop.permute.xlu0 %2078
        %2080 = vrot.lane.b32.xlu0 %v1949, 112
        %v2081 = vpop.permute.xlu0 %2080
        %2082 = vrot.lane.b32.xlu0 %v1951, 112
        %v2083 = vpop.permute.xlu0 %2082
        %v2084 = vsel %vm1154, %v2077, %v2081
        %v2085 = vsel %vm1154, %v2079, %v2083
        %v2086 = vsel %vm1154, %v2081, %v2077
        %v2087 = vsel %vm1154, %v2083, %v2079
        %v2088 = vsel %vm1161, %v2084, 0.0
        %v2089 = vsel %vm1162, %v2086, 0.0
        %v2090 = vsel %vm1161, %v2085, 0.0
        %v2091 = vsel %vm1162, %v2087, 0.0
        %2092 = vst [vmem:[#allocation2 + $0xe0] sm:$0xff] %v2088
        %2093 = vst [vmem:[#allocation2 + $0xe8] sm:$0xff] %v2089
        %2094 = vst [vmem:[#allocation2 + $0xf0] sm:$0xff] %v2090
        %2095 = vst [vmem:[#allocation2 + $0xf8] sm:$0xff] %v2091
        %2096 = vrot.lane.b32.xlu0 %v1948, 111
        %v2097 = vpop.permute.xlu0 %2096
        %2098 = vrot.lane.b32.xlu0 %v1950, 111
        %v2099 = vpop.permute.xlu0 %2098
        %2100 = vrot.lane.b32.xlu0 %v1949, 111
        %v2101 = vpop.permute.xlu0 %2100
        %2102 = vrot.lane.b32.xlu0 %v1951, 111
        %v2103 = vpop.permute.xlu0 %2102
        %v2104 = vsel %vm1179, %v2097, %v2101
        %v2105 = vsel %vm1179, %v2099, %v2103
        %v2106 = vsel %vm1179, %v2101, %v2097
        %v2107 = vsel %vm1179, %v2103, %v2099
        %v2108 = vsel %vm1186, %v2104, 0.0
        %v2109 = vsel %vm1187, %v2106, 0.0
        %v2110 = vsel %vm1186, %v2105, 0.0
        %v2111 = vsel %vm1187, %v2107, 0.0
        %2112 = vst [vmem:[#allocation2 + $0x100] sm:$0xff] %v2108
        %2113 = vst [vmem:[#allocation2 + $0x108] sm:$0xff] %v2109
        %2114 = vst [vmem:[#allocation2 + $0x110] sm:$0xff] %v2110
        %2115 = vst [vmem:[#allocation2 + $0x118] sm:$0xff] %v2111
        %v2116 = vld [vmem:[#allocation6] sm:$0xff]
        %v2117 = vld [vmem:[#allocation6 + $0x8] sm:$0xff]
        %v2118 = vld [vmem:[#allocation6 + $0x10] sm:$0xff]
        %v2119 = vld [vmem:[#allocation6 + $0x18] sm:$0xff]
        %v2120 = vld [vmem:[#allocation2] sm:$0xff]
        %v2121 = vld [vmem:[#allocation2 + $0x8] sm:$0xff]
        %v2122 = vld [vmem:[#allocation2 + $0x10] sm:$0xff]
        %v2123 = vld [vmem:[#allocation2 + $0x18] sm:$0xff]
        %v2124 = vld [vmem:[#allocation2 + $0x20] sm:$0xff]
        %v2125 = vld [vmem:[#allocation2 + $0x28] sm:$0xff]
        %v2126 = vld [vmem:[#allocation2 + $0x30] sm:$0xff]
        %v2127 = vld [vmem:[#allocation2 + $0x38] sm:$0xff]
        %v2128 = vld [vmem:[#allocation2 + $0x40] sm:$0xff]
        %v2129 = vld [vmem:[#allocation2 + $0x48] sm:$0xff]
        %v2130 = vld [vmem:[#allocation2 + $0x50] sm:$0xff]
        %v2131 = vld [vmem:[#allocation2 + $0x58] sm:$0xff]
        %v2132 = vld [vmem:[#allocation2 + $0x60] sm:$0xff]
        %v2133 = vld [vmem:[#allocation2 + $0x68] sm:$0xff]
        %v2134 = vld [vmem:[#allocation2 + $0x70] sm:$0xff]
        %v2135 = vld [vmem:[#allocation2 + $0x78] sm:$0xff]
        %v2136 = vld [vmem:[#allocation2 + $0x80] sm:$0xff]
        %v2137 = vld [vmem:[#allocation2 + $0x88] sm:$0xff]
        %v2138 = vld [vmem:[#allocation2 + $0x90] sm:$0xff]
        %v2139 = vld [vmem:[#allocation2 + $0x98] sm:$0xff]
        %v2140 = vld [vmem:[#allocation2 + $0xa0] sm:$0xff]
        %v2141 = vld [vmem:[#allocation2 + $0xa8] sm:$0xff]
        %v2142 = vld [vmem:[#allocation2 + $0xb0] sm:$0xff]
        %v2143 = vld [vmem:[#allocation2 + $0xb8] sm:$0xff]
        %v2144 = vld [vmem:[#allocation2 + $0xc0] sm:$0xff]
        %v2145 = vld [vmem:[#allocation2 + $0xc8] sm:$0xff]
        %v2146 = vld [vmem:[#allocation2 + $0xd0] sm:$0xff]
        %v2147 = vld [vmem:[#allocation2 + $0xd8] sm:$0xff]
        %v2148 = vld [vmem:[#allocation2 + $0xe0] sm:$0xff]
        %v2149 = vld [vmem:[#allocation2 + $0xe8] sm:$0xff]
        %v2150 = vld [vmem:[#allocation2 + $0xf0] sm:$0xff]
        %v2151 = vld [vmem:[#allocation2 + $0xf8] sm:$0xff]
        %v2152 = vld [vmem:[#allocation2 + $0x100] sm:$0xff]
        %v2153 = vld [vmem:[#allocation2 + $0x108] sm:$0xff]
        %v2154 = vld [vmem:[#allocation2 + $0x110] sm:$0xff]
        %v2155 = vld [vmem:[#allocation2 + $0x118] sm:$0xff]
        %v2156 = vld [vmem:[#allocation2 + $0x120] sm:$0xff]
        %v2157 = vld [vmem:[#allocation2 + $0x128] sm:$0xff]
        %v2158 = vld [vmem:[#allocation2 + $0x130] sm:$0xff]
        %v2159 = vld [vmem:[#allocation2 + $0x138] sm:$0xff]
        %vm2160 = vcmask 261120
        %v2162 = vsel %vm2160, %v2117, 0
        %v2165 = vsel %vm2160, %v2119, 0
        %2167 = vmatprep.subr.mxu0 %v2121
        %2168 = vmatpush1.msra.mxu0 %v2120
        %2169 = vmatprep.subr.mxu0 %v2123
        %2170 = vmatpush1.msra.mxu0 %v2122
        %2171 = vmatprep.subr.mxu0 %v2125
        %2172 = vmatpush1.msra.mxu0 %v2124
        %2173 = vmatprep.subr.mxu0 %v2127
        %2174 = vmatpush1.msra.mxu0 %v2126
        %2175 = vmatprep.subr.mxu0 %v2129
        %2176 = vmatpush1.msra.mxu0 %v2128
        %2177 = vmatprep.subr.mxu0 %v2131
        %2178 = vmatpush1.msra.mxu0 %v2130
        %2179 = vmatprep.subr.mxu0 %v2133
        %2180 = vmatpush1.msra.mxu0 %v2132
        %2181 = vmatprep.subr.mxu0 %v2135
        %2182 = vmatpush1.msra.mxu0 %v2134
        %2183 = vmatprep.subr.mxu0 %v2137
        %2184 = vmatpush1.msra.mxu0 %v2136
        %2185 = vmatprep.subr.mxu0 %v2139
        %2186 = vmatpush1.msra.mxu0 %v2138
        %2187 = vmatprep.subr.mxu0 %v2141
        %2188 = vmatpush1.msra.mxu0 %v2140
        %2189 = vmatprep.subr.mxu0 %v2143
        %2190 = vmatpush1.msra.mxu0 %v2142
        %2191 = vmatprep.subr.mxu0 %v2145
        %2192 = vmatpush1.msra.mxu0 %v2144
        %2193 = vmatprep.subr.mxu0 %v2147
        %2194 = vmatpush1.msra.mxu0 %v2146
        %2195 = vmatprep.subr.mxu0 %v2149
        %2196 = vmatpush1.msra.mxu0 %v2148
        %2197 = vmatprep.subr.mxu0 %v2151
        %2198 = vmatpush1.msra.mxu0 %v2150
        %2199 = vmatprep.subr.mxu0 %v2153
        %2200 = vmatpush1.msra.mxu0 %v2152
        %2201 = vmatprep.subr.mxu0 %v2155
        %2202 = vmatpush1.msra.mxu0 %v2154
        %2203 = vmatprep.subr.mxu0 %v2157
        %2204 = vmatpush1.msra.mxu0 %v2156
        %2205 = vmatprep.subr.mxu0 %v2159
        %2206 = vmatpush1.msra.mxu0 %v2158
        %2207 = vmatprep.subr.mxu0 0.0
        %2208 = vmatpush1.msra.mxu0 0.0
        %2209 = vmatprep.subr.mxu0 0.0
        %2210 = vmatpush1.msra.mxu0 0.0
        %2211 = vmatprep.subr.mxu0 0.0
        %2212 = vmatpush1.msra.mxu0 0.0
        %2213 = vmatprep.subr.mxu0 0.0
        %2214 = vmatpush1.msra.mxu0 0.0
        %2215 = vmatprep.subr.mxu0 0.0
        %2216 = vmatpush1.msra.mxu0 0.0
        %2217 = vmatprep.subr.mxu0 0.0
        %2218 = vmatpush1.msra.mxu0 0.0
        %2219 = vmatprep.subr.mxu0 0.0
        %2220 = vmatpush1.msra.mxu0 0.0
        %2221 = vmatprep.subr.mxu0 0.0
        %2222 = vmatpush1.msra.mxu0 0.0
        %2223 = vmatprep.subr.mxu0 0.0
        %2224 = vmatpush1.msra.mxu0 0.0
        %2225 = vmatprep.subr.mxu0 0.0
        %2226 = vmatpush1.msra.mxu0 0.0
        %2227 = vmatprep.subr.mxu0 0.0
        %2228 = vmatpush1.msra.mxu0 0.0
        %2229 = vmatprep.subr.mxu0 0.0
        %2230 = vmatpush1.msra.mxu0 0.0
        %2231 = vmatprep.mubr.f32.mxu0 %v2162
        %2232 = vmatmul.mubr.f32.gmra.mrb[0].mxu0 %v2116
        %v2233 = vpop.f32.mrb[0].mxu0
        %v2234 = vadd.f32 0.0, %v2233
        %v2235 = vpop.f32.mrb[0].mxu0
        %v2236 = vadd.f32 0.0, %v2235
        %2237 = vmatprep.mubr.f32.mxu0 %v2165
        %2238 = vmatmul.mubr.f32.gmra.mrb[0].mxu0 %v2118
        %v2239 = vpop.f32.mrb[0].mxu0
        %v2240 = vadd.f32 0.0, %v2239
        %v2241 = vpop.f32.mrb[0].mxu0
        %v2242 = vadd.f32 0.0, %v2241
        %2243 = vdwg.mxu0
        %2244 = vst [vmem:[%s301] sm:$0xff] %v2234
        %2245 = vst [vmem:[%s301 + $0x8] sm:$0xff] %v2236
        %2246 = vst [vmem:[%s301 + $0x10] sm:$0xff] %v2240
        %2247 = vst [vmem:[%s301 + $0x18] sm:$0xff] %v2242
        %s2248 = sand.u32 %s183, 1
        %s2249 = scalar_lea.sflag [#allocation5], %s2248
        %s2250 = sand.u32 %s183, 1
        %s2251 = smul.addr %s2250, 32
        %s2252 = scalar_lea.vmem [#allocation8], %s2251
        // Predicated region
        $region57: #{tpu_custom_call.1} parent=47 // pred_check
          %p2253 = pneg %p193
        $region58: #{tpu_custom_call.1} parent=47 // pred_check_branch
          %2255 = sbr.rel (%p2253) target = $region60
        $region59: #{tpu_custom_call.1} parent=47 // pred_region
          %s2257 = ssub.s32 512, 512
          %2258 = vsyncadd %s2249, %s2257
          %s2259 = smul.addr %s23, 4
          %s2260 = smul.addr %s2259, 128
          %s2261 = scalar_lea.hbm %s7, %s2260
          %s2262 = sshll.u32 %s2252, 4
          %s2263 = int_to_ptr.vmem [resolvable:$true] %s2262
          %2268 = dma.vmem_to_hbm [thread:$0]  %s2263, 512, %s2261, %s2249, 256, 256, 16
        $region60: #{tpu_custom_call.1} parent=47 // pred_fallthru
          _
      $region48: #{tpu_custom_call.1} parent=5 // pred_fallthru
        _
      %p2269 = scmp.le.s32.totalorder 2, %s18
      // Predicated region
      $region61: #{tpu_custom_call.1} parent=5 // pred_check
        %p2270 = pneg %p2269
      $region62: #{tpu_custom_call.1} parent=5 // pred_check_branch
        %2272 = sbr.rel (%p2270) target = $region64
      $region63: #{tpu_custom_call.1} parent=5 // pred_region
        %s2273 = ssub.s32 %s18, 2
        // Predicated region
        $region65: #{tpu_custom_call.1} parent=63 // pred_check
          %p2274 = pneg %p199
        $region66: #{tpu_custom_call.1} parent=63 // pred_check_branch
          %2276 = sbr.rel (%p2274) target = $region68
        $region67: #{tpu_custom_call.1} parent=63 // pred_region
          %s2277 = sand.u32 %s184, 1
          %s2278 = scalar_lea.sflag [#allocation5], %s2277
          %s2279 = sand.u32 %s184, 1
          %s2280 = smul.addr %s2279, 32
          %s2281 = scalar_lea.vmem [#allocation8], %s2280
          %2282 = dma.done %s2278, 512
        $region68: #{tpu_custom_call.1} parent=63 // pred_fallthru
          _
      $region64: #{tpu_custom_call.1} parent=5 // pred_fallthru
        _
    $region6: #{tpu_custom_call.1} parent=1 // loop_footer
      %s22 = sadd.s32 1, %s18
    $region7: #{tpu_custom_call.1} parent=1 // loop_footer_branch
      %17 = sbr.rel target = $region3
    $region8: #{tpu_custom_call.1} parent=1 // loop_exit
      _
    %2283 = vsyncpa [#allocation4], 1
    %s2284 = scalar_lea.sflag [#allocation4], 1
    %2285 = vsyncpa %s2284, 1
    %2286 = vsyncpa [#allocation7], 1
    %2287 = vsyncpa [#allocation5], 1
    %s2288 = scalar_lea.sflag [#allocation5], 1
    %2289 = vsyncpa %s2288, 1

</llo_original>
